<compile_context>
chip_gen: v7x
topology: tpu7x:2x2x1
jax: 0.10.0
libtpu: 0.0.40
codegen_flags: <defaults>
</compile_context>

<pallas_src>
import functools

import jax
import jax.numpy as jnp
from jax.experimental import pallas as pl
from jax.experimental.pallas import tpu as pltpu

C_PAD = 128  # lane-dense class dimension


def _round_up(x, m):
    return ((x + m - 1) // m) * m


def _vmem_capacity_bytes():
    try:
        cap = getattr(pltpu.get_tpu_info(), "vmem_capacity_bytes", None)
        if cap:
            return int(cap)
    except Exception:
        pass
    return 64 * 1024 * 1024  # conservative fallback (v7x per-TC VMEM)


def _pick_divisor_tile(n_pad, max_tile):
    """Largest multiple-of-128 divisor of n_pad that is <= max_tile."""
    best = 128
    t = 128
    while t <= min(n_pad, max_tile):
        if n_pad % t == 0:
            best = t
        t += 128
    return best


def _pick_tile_n(n_pad, adj_itemsize, budget_bytes):
    """Adjacency row tile.  Whole matrix resident when it fits the budget
    (counted double-buffered for safety), else the largest divisor tile whose
    double-buffered slab fits."""
    if 2 * n_pad * n_pad * adj_itemsize <= budget_bytes:
        return n_pad
    best = 128
    t = 128
    while t <= min(n_pad, 2048):
        if n_pad % t == 0 and 2 * t * n_pad * adj_itemsize <= budget_bytes:
            best = t
        t += 128
    return best


# ----------------------------------------------------------------------------
# Kernel 1: MLP feature transform (row-tiled, fully parallel across tiles).
# ----------------------------------------------------------------------------
def _mlp_kernel(feat_ref, w1_ref, b1_ref, w2_ref, b2_ref, out_ref):
    h = jnp.dot(feat_ref[...], w1_ref[...], preferred_element_type=jnp.float32)
    h = jnp.maximum(h + b1_ref[...], 0.0)
    out_ref[...] = (
        jnp.dot(h, w2_ref[...], preferred_element_type=jnp.float32) + b2_ref[...]
    )


def mlp_transform(features, w1, b1, w2, b2, *, tile_m, vmem_cap):
    n_pad, f = features.shape
    hdim = w1.shape[1]
    c_pad = w2.shape[1]
    num_tiles = n_pad // tile_m

    flops = 2 * n_pad * f * hdim + 2 * n_pad * hdim * c_pad
    bytes_accessed = 4 * (n_pad * f + f * hdim + hdim + hdim * c_pad + c_pad
                          + n_pad * c_pad)
    vmem_need = 4 * (2 * tile_m * f + f * hdim + hdim + hdim * c_pad + c_pad
                     + 2 * tile_m * c_pad + tile_m * hdim)
    vmem_limit = int(min(max(vmem_need + (2 << 20), 8 << 20),
                         int(vmem_cap * 0.9)))

    return pl.pallas_call(
        _mlp_kernel,
        out_shape=jax.ShapeDtypeStruct((n_pad, c_pad), jnp.float32),
        grid=(num_tiles,),
        in_specs=[
            pl.BlockSpec((tile_m, f), lambda i: (i, 0)),
            pl.BlockSpec((f, hdim), lambda i: (0, 0)),
            pl.BlockSpec((1, hdim), lambda i: (0, 0)),
            pl.BlockSpec((hdim, c_pad), lambda i: (0, 0)),
            pl.BlockSpec((1, c_pad), lambda i: (0, 0)),
        ],
        out_specs=pl.BlockSpec((tile_m, c_pad), lambda i: (i, 0)),
        compiler_params=pltpu.CompilerParams(
            dimension_semantics=("parallel",),
            vmem_limit_bytes=vmem_limit,
        ),
        cost_estimate=pl.CostEstimate(
            flops=flops, transcendentals=0, bytes_accessed=bytes_accessed),
    )(features, w1, b1, w2, b2)


# ----------------------------------------------------------------------------
# Kernel 2: APPNP propagation, grid = (K, row_tiles).
# Ping-pong state lives in {out_ref, x_alt}; parity chosen so the final step
# writes into out_ref (which Pallas writes back to HBM exactly once).
# ----------------------------------------------------------------------------
def _propagate_kernel(logits0_ref, adj_ref, out_ref, x_alt,
                      *, tile_n, alpha, k_total):
    k = pl.program_id(0)   # propagation step (outer, sequential/"arbitrary")
    i = pl.program_id(1)   # node-row tile    (inner, sequential/"arbitrary")
    row0 = pl.multiple_of(i * tile_n, 128)

    # x_0 = logits: copy the resident logits block into the source buffer of
    # step 0 exactly once.
    @pl.when(jnp.logical_and(k == 0, i == 0))
    def _():
        if k_total % 2 == 0:
            out_ref[...] = logits0_ref[...]
        else:
            x_alt[...] = logits0_ref[...]

    def step(src_ref, dst_ref):
        # adj may be stored bf16 in HBM; accumulate in f32.  (1-alpha) and
        # alpha*logits are applied on the small (tile_n, c_pad) result.
        adj = adj_ref[...].astype(jnp.float32)
        x_new = (1.0 - alpha) * jnp.dot(adj, src_ref[...],
                                        preferred_element_type=jnp.float32)
        x_new = x_new + alpha * logits0_ref[pl.ds(row0, tile_n), :]
        dst_ref[pl.ds(row0, tile_n), :] = x_new

    # Source of step k is out_ref iff (k % 2) == (k_total % 2); this parity
    # guarantees the destination of step k_total-1 is out_ref.
    src_is_out = (k % 2) == (k_total % 2)

    @pl.when(src_is_out)
    def _():
        step(out_ref, x_alt)

    @pl.when(jnp.logical_not(src_is_out))
    def _():
        step(x_alt, out_ref)


def appnp_propagate(logits, adj, *, alpha, n_propagation, tile_n, vmem_cap):
    n_pad, c_pad = logits.shape
    num_tiles = n_pad // tile_n
    adj_itemsize = jnp.dtype(adj.dtype).itemsize
    adj_resident = tile_n == n_pad   # constant adj block index => DMA'd once

    flops = 2 * n_propagation * n_pad * n_pad * c_pad
    adj_stream = n_pad * n_pad * adj_itemsize * (1 if adj_resident else n_propagation)
    bytes_accessed = adj_stream + 4 * 2 * n_pad * c_pad

    vmem_need = (2 * tile_n * n_pad * adj_itemsize   # adj slab (double-buffered)
                 + 2 * n_pad * c_pad * 4             # resident logits0
                 + 2 * n_pad * c_pad * 4             # resident out
                 + n_pad * c_pad * 4)                # x_alt scratch
    vmem_limit = int(min(max(vmem_need + (4 << 20), 16 << 20),
                         int(vmem_cap * 0.9)))

    kernel = functools.partial(_propagate_kernel, tile_n=tile_n, alpha=alpha,
                               k_total=n_propagation)
    return pl.pallas_call(
        kernel,
        out_shape=jax.ShapeDtypeStruct((n_pad, c_pad), jnp.float32),
        grid=(n_propagation, num_tiles),
        in_specs=[
            pl.BlockSpec((n_pad, c_pad), lambda k, i: (0, 0)),    # logits0 (resident)
            pl.BlockSpec((tile_n, n_pad), lambda k, i: (i, 0)),   # A_hat row tile
        ],
        out_specs=pl.BlockSpec((n_pad, c_pad), lambda k, i: (0, 0)),  # resident out
        scratch_shapes=[
            pltpu.VMEM((n_pad, c_pad), jnp.float32),   # x_alt ping-pong buffer
        ],
        compiler_params=pltpu.CompilerParams(
            # BOTH axes must stay sequential ("arbitrary"): the ping-pong
            # state (out_ref / x_alt) is shared across every tile of every
            # step; megacore-sharding either axis would break correctness.
            dimension_semantics=("arbitrary", "arbitrary"),
            vmem_limit_bytes=vmem_limit,
        ),
        cost_estimate=pl.CostEstimate(
            flops=flops, transcendentals=0, bytes_accessed=bytes_accessed),
    )(logits, adj)


# ----------------------------------------------------------------------------
# Top-level forward (padding / tiling glue in plain JAX).
# ----------------------------------------------------------------------------
def appnp_forward(features, w1, b1, w2, b2, adj_norm, *,
                  alpha: float = 0.1, n_propagation: int = 10,
                  tile_n=None, adj_dtype=jnp.float32):
    n, f = features.shape
    hdim = w1.shape[1]
    c = w2.shape[1]

    n_pad = max(_round_up(n, 128), _round_up(adj_norm.shape[0], 128))
    c_pad = _round_up(max(c, 1), C_PAD)
    adj_itemsize = jnp.dtype(adj_dtype).itemsize
    vmem_cap = _vmem_capacity_bytes()

    # --- lane/tile-friendly padding (results sliced back at the end) ---
    feat_p = jnp.zeros((n_pad, f), jnp.float32).at[:n, :].set(
        features.astype(jnp.float32))
    w1_p = w1.astype(jnp.float32)
    w2_p = jnp.zeros((hdim, c_pad), jnp.float32).at[:, :c].set(
        w2.astype(jnp.float32))
    b1_p = b1.reshape(1, -1).astype(jnp.float32)
    b2_p = jnp.zeros((1, c_pad), jnp.float32).at[:, :c].set(
        b2.reshape(1, -1).astype(jnp.float32))
    if adj_norm.shape == (n_pad, n_pad):
        adj_p = adj_norm.astype(adj_dtype)   # pre-padded by caller: no extra pass
    else:
        adj_p = (jnp.zeros((n_pad, n_pad), adj_dtype)
                 .at[:adj_norm.shape[0], :adj_norm.shape[1]]
                 .set(adj_norm.astype(adj_dtype)))

    # --- tile selection ---
    tile_m = _pick_divisor_tile(n_pad, max_tile=2048)   # MLP row tile (cheap per-tile VMEM)
    if tile_n is None:
        state_bytes = 5 * n_pad * c_pad * 4             # logits0(2x)+out(2x)+x_alt
        adj_budget = max(int(vmem_cap * 0.72) - state_bytes, 8 << 20)
        tile_n = _pick_tile_n(n_pad, adj_itemsize, adj_budget)
    assert n_pad % tile_n == 0 and tile_n % 128 == 0

    logits = mlp_transform(feat_p, w1_p, b1_p, w2_p, b2_p,
                           tile_m=tile_m, vmem_cap=vmem_cap)

    if n_propagation == 0:
        return logits[:n, :c]

    out = appnp_propagate(logits, adj_p, alpha=alpha,
                          n_propagation=n_propagation, tile_n=tile_n,
                          vmem_cap=vmem_cap)
    return out[:n, :c]


# ----------------------------------------------------------------------------
# Glue (plain JAX): dense normalized adjacency == normg() + propagate matrix.
# Built directly at the padded size to avoid an extra N^2 materialization.
# ----------------------------------------------------------------------------
def build_normalized_adjacency(edge_index, num_nodes, edge_weight=None,
                               padded_size=None):
    size = int(padded_size) if padded_size is not None else int(num_nodes)
    row, col = edge_index[0], edge_index[1]
    if edge_weight is None:
        edge_weight = jnp.ones(row.shape, dtype=jnp.float32)

    # dense A[row, col] = sum of edge weights
    a = jnp.zeros((size, size), jnp.float32).at[row, col].add(edge_weight)

    # add_remaining_self_loops(fill_value=1) for real (non-padded) nodes only
    is_self = (row == col).astype(jnp.float32)
    has_self = jnp.zeros((size,), jnp.float32).at[row].add(is_self) > 0
    node_valid = jnp.arange(size) < num_nodes
    a = a + jnp.diag(jnp.where(
        jnp.logical_and(node_valid, jnp.logical_not(has_self)), 1.0, 0.0))

    deg = a.sum(axis=1)
    d_inv_sqrt = jnp.where(deg > 0, 1.0 / jnp.sqrt(deg), 0.0)
    norm = d_inv_sqrt[:, None] * a * d_inv_sqrt[None, :]

    # PyG aggregates messages x_j = x[row] at target col  =>  M[col, row]
    return norm.T


# ----------------------------------------------------------------------------
# Pure-JAX reference for correctness check.
# ----------------------------------------------------------------------------
def appnp_reference(features, w1, b1, w2, b2, adj_norm, alpha, k):
    h = jnp.maximum(features @ w1 + b1, 0.0)
    logits = h @ w2 + b2
    x = logits
    for _ in range(k):
        x = (1.0 - alpha) * (adj_norm @ x) + alpha * logits
    return x


if __name__ == "__main__":
    N_NODES = 200        # pads to 256 (exercises tiling + padding)
    N_FEATURES = 32
    HIDDEN = 64
    N_CLASSES = 8
    ALPHA = 0.1
    K = 10

    key = jax.random.PRNGKey(0)
    k_feat, k_w1, k_b1, k_w2, k_b2 = jax.random.split(key, 5)

    features = jax.random.normal(k_feat, (N_NODES, N_FEATURES), jnp.float32)

    # Deterministic parameter init (uniform, PyTorch-Linear-like scale).
    lim1 = 1.0 / (N_FEATURES ** 0.5)
    w1 = jax.random.uniform(k_w1, (N_FEATURES, HIDDEN), jnp.float32, -lim1, lim1)
    b1 = jax.random.uniform(k_b1, (1, HIDDEN), jnp.float32, -lim1, lim1)
    lim2 = 1.0 / (HIDDEN ** 0.5)
    w2 = jax.random.uniform(k_w2, (HIDDEN, N_CLASSES), jnp.float32, -lim2, lim2)
    b2 = jax.random.uniform(k_b2, (1, N_CLASSES), jnp.float32, -lim2, lim2)

    # Simple undirected ring graph (no self-loops; normg adds them).
    src = jnp.arange(N_NODES, dtype=jnp.int32)
    dst = (src + 1) % N_NODES
    edge_index = jnp.stack([jnp.concatenate([src, dst]),
                            jnp.concatenate([dst, src])], axis=0)

    n_pad = _round_up(N_NODES, 128)
    adj_norm = build_normalized_adjacency(edge_index, N_NODES, padded_size=n_pad)

    ref = appnp_reference(features, w1, b1, w2, b2,
                          adj_norm[:N_NODES, :N_NODES], ALPHA, K)

    # 1) auto tiling: adjacency fits VMEM -> resident fast path, f32 adj.
    fwd = jax.jit(functools.partial(appnp_forward, alpha=ALPHA, n_propagation=K))
    out = jax.block_until_ready(fwd(features, w1, b1, w2, b2, adj_norm))
    assert out.shape == (N_NODES, N_CLASSES)
    assert jnp.allclose(out, ref, atol=1e-3, rtol=1e-3), "mismatch (resident path)"

    # 2) forced streaming path (tile_n < n_pad), f32 adj.
    fwd_stream = jax.jit(functools.partial(appnp_forward, alpha=ALPHA,
                                           n_propagation=K, tile_n=128))
    out_s = jax.block_until_ready(fwd_stream(features, w1, b1, w2, b2, adj_norm))
    assert jnp.allclose(out_s, ref, atol=1e-3, rtol=1e-3), "mismatch (streaming path)"

    # 3) streaming path with bf16 adjacency (large-graph, memory-bound config).
    adj_bf = adj_norm[:N_NODES, :N_NODES].astype(jnp.bfloat16).astype(jnp.float32)
    ref_bf = appnp_reference(features, w1, b1, w2, b2, adj_bf, ALPHA, K)
    fwd_bf = jax.jit(functools.partial(appnp_forward, alpha=ALPHA, n_propagation=K,
                                       tile_n=128, adj_dtype=jnp.bfloat16))
    out_b = jax.block_until_ready(fwd_bf(features, w1, b1, w2, b2, adj_norm))
    assert jnp.allclose(out_b, ref_bf, atol=2e-3, rtol=2e-3), "mismatch (bf16 adj)"

    print("KERNEL_OK")
</pallas_src>

<mosaic_0001>
module attributes {stable_mosaic.version = 11 : i64} {
  func.func @_mlp_kernel(%arg0: i32, %arg1: memref<256x32xf32, #tpu.memory_space<vmem>>, %arg2: memref<32x64xf32, #tpu.memory_space<vmem>>, %arg3: memref<1x64xf32, #tpu.memory_space<vmem>>, %arg4: memref<64x128xf32, #tpu.memory_space<vmem>>, %arg5: memref<1x128xf32, #tpu.memory_space<vmem>>, %arg6: memref<256x128xf32, #tpu.memory_space<vmem>>) attributes {dimension_semantics = [#tpu.dimension_semantics<parallel>], iteration_bounds = array<i64: 1>, scalar_prefetch = 0 : i64, scratch_operands = 0 : i64, tpu.core_type = #tpu.core_type<tc>, window_params = [{transform_indices = @transform_0, window_bounds = array<i64: 256, 32>}, {pipeline_mode = #tpu.pipeline_mode<synchronous>, transform_indices = @transform_1, window_bounds = array<i64: 32, 64>}, {pipeline_mode = #tpu.pipeline_mode<synchronous>, transform_indices = @transform_2, window_bounds = array<i64: 1, 64>}, {pipeline_mode = #tpu.pipeline_mode<synchronous>, transform_indices = @transform_3, window_bounds = array<i64: 64, 128>}, {pipeline_mode = #tpu.pipeline_mode<synchronous>, transform_indices = @transform_4, window_bounds = array<i64: 1, 128>}, {transform_indices = @transform_5, window_bounds = array<i64: 256, 128>}]} {
    %c0 = arith.constant 0 : index
    %c0_0 = arith.constant 0 : index
    %0 = vector.load %arg1[%c0, %c0_0] : memref<256x32xf32, #tpu.memory_space<vmem>>, vector<256x32xf32>
    %c0_1 = arith.constant 0 : index
    %c0_2 = arith.constant 0 : index
    %1 = vector.load %arg2[%c0_1, %c0_2] : memref<32x64xf32, #tpu.memory_space<vmem>>, vector<32x64xf32>
    %cst = arith.constant dense<0.000000e+00> : vector<256x64xf32>
    %2 = tpu.matmul %0, %1, %cst {dimension_numbers = #tpu.dot_dimension_numbers<[1], [0], [0], [1], [0, 0, 1, 1], [], []>} : vector<256x32xf32>, vector<32x64xf32>, vector<256x64xf32> -> vector<256x64xf32>
    %c0_3 = arith.constant 0 : index
    %c0_4 = arith.constant 0 : index
    %3 = vector.load %arg3[%c0_3, %c0_4] : memref<1x64xf32, #tpu.memory_space<vmem>>, vector<1x64xf32>
    %4 = vector.broadcast %3 : vector<1x64xf32> to vector<256x64xf32>
    %5 = arith.addf %2, %4 : vector<256x64xf32>
    %cst_5 = arith.constant 0.000000e+00 : f32
    %6 = vector.broadcast %cst_5 : f32 to vector<256x64xf32>
    %7 = arith.maximumf %5, %6 : vector<256x64xf32>
    %c0_6 = arith.constant 0 : index
    %c0_7 = arith.constant 0 : index
    %8 = vector.load %arg4[%c0_6, %c0_7] : memref<64x128xf32, #tpu.memory_space<vmem>>, vector<64x128xf32>
    %cst_8 = arith.constant dense<0.000000e+00> : vector<256x128xf32>
    %9 = tpu.matmul %7, %8, %cst_8 {dimension_numbers = #tpu.dot_dimension_numbers<[1], [0], [0], [1], [0, 0, 1, 1], [], []>} : vector<256x64xf32>, vector<64x128xf32>, vector<256x128xf32> -> vector<256x128xf32>
    %c0_9 = arith.constant 0 : index
    %c0_10 = arith.constant 0 : index
    %10 = vector.load %arg5[%c0_9, %c0_10] : memref<1x128xf32, #tpu.memory_space<vmem>>, vector<1x128xf32>
    %11 = vector.broadcast %10 : vector<1x128xf32> to vector<256x128xf32>
    %12 = arith.addf %9, %11 : vector<256x128xf32>
    %c0_11 = arith.constant 0 : index
    %c0_12 = arith.constant 0 : index
    %13 = vector.load %arg6[%c0_11, %c0_12] : memref<256x128xf32, #tpu.memory_space<vmem>>, vector<256x128xf32>
    tpu.vector_store %arg6[%c0_11, %c0_12], %12 {strides = array<i32>} : memref<256x128xf32, #tpu.memory_space<vmem>>, vector<256x128xf32>,
    return
  }
  func.func @transform_0(%arg0: i32) -> (i32, i32) {
    %c0_i32 = arith.constant 0 : i32
    %c0_i32_0 = arith.constant 0 : i32
    return %arg0, %c0_i32 : i32, i32
  }
  func.func @transform_1(%arg0: i32) -> (i32, i32) {
    %c0_i32 = arith.constant 0 : i32
    %c0_i32_0 = arith.constant 0 : i32
    %c0_i32_1 = arith.constant 0 : i32
    return %c0_i32, %c0_i32_0 : i32, i32
  }
  func.func @transform_2(%arg0: i32) -> (i32, i32) {
    %c0_i32 = arith.constant 0 : i32
    %c0_i32_0 = arith.constant 0 : i32
    %c0_i32_1 = arith.constant 0 : i32
    return %c0_i32, %c0_i32_0 : i32, i32
  }
  func.func @transform_3(%arg0: i32) -> (i32, i32) {
    %c0_i32 = arith.constant 0 : i32
    %c0_i32_0 = arith.constant 0 : i32
    %c0_i32_1 = arith.constant 0 : i32
    return %c0_i32, %c0_i32_0 : i32, i32
  }
  func.func @transform_4(%arg0: i32) -> (i32, i32) {
    %c0_i32 = arith.constant 0 : i32
    %c0_i32_0 = arith.constant 0 : i32
    %c0_i32_1 = arith.constant 0 : i32
    return %c0_i32, %c0_i32_0 : i32, i32
  }
  func.func @transform_5(%arg0: i32) -> (i32, i32) {
    %c0_i32 = arith.constant 0 : i32
    %c0_i32_0 = arith.constant 0 : i32
    return %arg0, %c0_i32 : i32, i32
  }
}

module attributes {stable_mosaic.version = 11 : i64} {
  func.func @_propagate_kernel(%arg0: i32, %arg1: i32, %arg2: memref<256x128xf32, #tpu.memory_space<vmem>>, %arg3: memref<256x256xf32, #tpu.memory_space<vmem>>, %arg4: memref<256x128xf32, #tpu.memory_space<vmem>>, %arg5: memref<256x128xf32, #tpu.memory_space<vmem>>) attributes {dimension_semantics = [#tpu.dimension_semantics<arbitrary>, #tpu.dimension_semantics<arbitrary>], iteration_bounds = array<i64: 10, 1>, scalar_prefetch = 0 : i64, scratch_operands = 1 : i64, tpu.core_type = #tpu.core_type<tc>, window_params = [{pipeline_mode = #tpu.pipeline_mode<synchronous>, transform_indices = @transform_0, window_bounds = array<i64: 256, 128>}, {transform_indices = @transform_1, window_bounds = array<i64: 256, 256>}, {pipeline_mode = #tpu.pipeline_mode<synchronous>, transform_indices = @transform_2, window_bounds = array<i64: 256, 128>}]} {
    %c256_i32 = arith.constant 256 : i32
    %0 = arith.muli %arg1, %c256_i32 : i32
    %1 = tpu.assume_multiple %0, 128 : i32
    %c0_i32 = arith.constant 0 : i32
    %2 = arith.cmpi eq, %arg0, %c0_i32 : i32
    %c0_i32_0 = arith.constant 0 : i32
    %3 = arith.cmpi eq, %arg1, %c0_i32_0 : i32
    %4 = arith.andi %2, %3 : i1
    %5 = arith.extui %4 : i1 to i32
    %c0_i32_1 = arith.constant 0 : i32
    %6 = arith.cmpi ne, %5, %c0_i32_1 : i32
    scf.if %6 {
      %c0 = arith.constant 0 : index
      %c0_9 = arith.constant 0 : index
      %23 = vector.load %arg2[%c0, %c0_9] : memref<256x128xf32, #tpu.memory_space<vmem>>, vector<256x128xf32>
      %c0_10 = arith.constant 0 : index
      %c0_11 = arith.constant 0 : index
      %24 = vector.load %arg4[%c0_10, %c0_11] : memref<256x128xf32, #tpu.memory_space<vmem>>, vector<256x128xf32>
      tpu.vector_store %arg4[%c0_10, %c0_11], %23 {strides = array<i32>} : memref<256x128xf32, #tpu.memory_space<vmem>>, vector<256x128xf32>,
    } else {
    }
    %c2_i32 = arith.constant 2 : i32
    %c0_i32_2 = arith.constant 0 : i32
    %7 = arith.cmpi eq, %c2_i32, %c0_i32_2 : i32
    %c1_i32 = arith.constant 1 : i32
    %8 = arith.select %7, %c1_i32, %c2_i32 : i32
    %9 = arith.remsi %arg0, %8 : i32
    %c0_i32_3 = arith.constant 0 : i32
    %10 = arith.cmpi ne, %9, %c0_i32_3 : i32
    %c0_i32_4 = arith.constant 0 : i32
    %11 = arith.cmpi slt, %9, %c0_i32_4 : i32
    %c0_i32_5 = arith.constant 0 : i32
    %12 = arith.cmpi slt, %8, %c0_i32_5 : i32
    %13 = arith.xori %11, %12 : i1
    %14 = arith.andi %13, %10 : i1
    %15 = arith.addi %9, %8 : i32
    %16 = arith.select %14, %15, %9 : i32
    %c0_i32_6 = arith.constant 0 : i32
    %17 = arith.cmpi eq, %16, %c0_i32_6 : i32
    %18 = arith.extui %17 : i1 to i32
    %c0_i32_7 = arith.constant 0 : i32
    %19 = arith.cmpi ne, %18, %c0_i32_7 : i32
    scf.if %19 {
      %c0 = arith.constant 0 : index
      %c0_9 = arith.constant 0 : index
      %23 = vector.load %arg3[%c0, %c0_9] : memref<256x256xf32, #tpu.memory_space<vmem>>, vector<256x256xf32>
      %c0_10 = arith.constant 0 : index
      %c0_11 = arith.constant 0 : index
      %24 = vector.load %arg4[%c0_10, %c0_11] : memref<256x128xf32, #tpu.memory_space<vmem>>, vector<256x128xf32>
      %cst = arith.constant dense<0.000000e+00> : vector<256x128xf32>
      %25 = tpu.matmul %23, %24, %cst {dimension_numbers = #tpu.dot_dimension_numbers<[1], [0], [0], [1], [0, 0, 1, 1], [], []>} : vector<256x256xf32>, vector<256x128xf32>, vector<256x128xf32> -> vector<256x128xf32>
      %cst_12 = arith.constant 0.899999976 : f32
      %26 = vector.broadcast %cst_12 : f32 to vector<256x128xf32>
      %27 = arith.mulf %26, %25 : vector<256x128xf32>
      %28 = arith.index_cast %1 : i32 to index
      %c0_13 = arith.constant 0 : index
      %29 = vector.load %arg2[%28, %c0_13] : memref<256x128xf32, #tpu.memory_space<vmem>>, vector<256x128xf32>
      %cst_14 = arith.constant 1.000000e-01 : f32
      %30 = vector.broadcast %cst_14 : f32 to vector<256x128xf32>
      %31 = arith.mulf %30, %29 : vector<256x128xf32>
      %32 = arith.addf %27, %31 : vector<256x128xf32>
      %33 = arith.index_cast %1 : i32 to index
      %c0_15 = arith.constant 0 : index
      %34 = vector.load %arg5[%33, %c0_15] : memref<256x128xf32, #tpu.memory_space<vmem>>, vector<256x128xf32>
      tpu.vector_store %arg5[%33, %c0_15], %32 {strides = array<i32>} : memref<256x128xf32, #tpu.memory_space<vmem>>, vector<256x128xf32>,
    } else {
    }
    %true = arith.constant true
    %20 = arith.xori %17, %true : i1
    %21 = arith.extui %20 : i1 to i32
    %c0_i32_8 = arith.constant 0 : i32
    %22 = arith.cmpi ne, %21, %c0_i32_8 : i32
    scf.if %22 {
      %c0 = arith.constant 0 : index
      %c0_9 = arith.constant 0 : index
      %23 = vector.load %arg3[%c0, %c0_9] : memref<256x256xf32, #tpu.memory_space<vmem>>, vector<256x256xf32>
      %c0_10 = arith.constant 0 : index
      %c0_11 = arith.constant 0 : index
      %24 = vector.load %arg5[%c0_10, %c0_11] : memref<256x128xf32, #tpu.memory_space<vmem>>, vector<256x128xf32>
      %cst = arith.constant dense<0.000000e+00> : vector<256x128xf32>
      %25 = tpu.matmul %23, %24, %cst {dimension_numbers = #tpu.dot_dimension_numbers<[1], [0], [0], [1], [0, 0, 1, 1], [], []>} : vector<256x256xf32>, vector<256x128xf32>, vector<256x128xf32> -> vector<256x128xf32>
      %cst_12 = arith.constant 0.899999976 : f32
      %26 = vector.broadcast %cst_12 : f32 to vector<256x128xf32>
      %27 = arith.mulf %26, %25 : vector<256x128xf32>
      %28 = arith.index_cast %1 : i32 to index
      %c0_13 = arith.constant 0 : index
      %29 = vector.load %arg2[%28, %c0_13] : memref<256x128xf32, #tpu.memory_space<vmem>>, vector<256x128xf32>
      %cst_14 = arith.constant 1.000000e-01 : f32
      %30 = vector.broadcast %cst_14 : f32 to vector<256x128xf32>
      %31 = arith.mulf %30, %29 : vector<256x128xf32>
      %32 = arith.addf %27, %31 : vector<256x128xf32>
      %33 = arith.index_cast %1 : i32 to index
      %c0_15 = arith.constant 0 : index
      %34 = vector.load %arg4[%33, %c0_15] : memref<256x128xf32, #tpu.memory_space<vmem>>, vector<256x128xf32>
      tpu.vector_store %arg4[%33, %c0_15], %32 {strides = array<i32>} : memref<256x128xf32, #tpu.memory_space<vmem>>, vector<256x128xf32>,
    } else {
    }
    return
  }
  func.func @transform_0(%arg0: i32, %arg1: i32) -> (i32, i32) {
    %c0_i32 = arith.constant 0 : i32
    %c0_i32_0 = arith.constant 0 : i32
    %c0_i32_1 = arith.constant 0 : i32
    return %c0_i32, %c0_i32_0 : i32, i32
  }
  func.func @transform_1(%arg0: i32, %arg1: i32) -> (i32, i32) {
    %c0_i32 = arith.constant 0 : i32
    %c0_i32_0 = arith.constant 0 : i32
    return %arg1, %c0_i32 : i32, i32
  }
  func.func @transform_2(%arg0: i32, %arg1: i32) -> (i32, i32) {
    %c0_i32 = arith.constant 0 : i32
    %c0_i32_0 = arith.constant 0 : i32
    %c0_i32_1 = arith.constant 0 : i32
    return %c0_i32, %c0_i32_0 : i32, i32
  }
}

</mosaic_0001>

<llo_original>
// kernel: appnp_forward.2
$region0: #{appnp_forward.2}
  #allocation0 [shape = 'u32[]', space=smem, size = 0x4, offset = 0x4, fixed_abs, tag = 'smem constant byte address 0x4 - core index']
  #allocation1 [shape = 'u32[144,128]{1,0:T(1,128)}', space=vmem, size = 0x12000, scoped, tag = 'internal scratch']
  %s0 = inlined_call_operand.vmem [shape: f32[256,32], index: 0, kind: input, shape index: {}]
  %s1 = inlined_call_operand.vmem [shape: f32[32,64], index: 1, kind: input, shape index: {}]
  %s2 = inlined_call_operand.vmem [shape: f32[1,64], index: 2, kind: input, shape index: {}]
  %s3 = inlined_call_operand.vmem [shape: f32[64,128], index: 3, kind: input, shape index: {}]
  %s4 = inlined_call_operand.vmem [shape: f32[1,128], index: 4, kind: input, shape index: {}]
  %s5 = inlined_call_operand.vmem [shape: f32[256,128], index: 5, kind: output, shape index: {}]
  %s6 = sld [smem:[#allocation0]]
  $region30: #{appnp_forward.2} parent=0
    _
  %s8 = ssub.s32 1, %s6
  %s9 = scalar_select 0, %s8, %s6
  // Predicated region
  $region2: #{appnp_forward.2} parent=0 // pred_check
    _
  $region3: #{appnp_forward.2} parent=0 // pred_check_branch
    %11 = sbr.rel (0) target = $region5
  $region4: #{appnp_forward.2} parent=0 // pred_region
    _
  $region5: #{appnp_forward.2} parent=0 // pred_fallthru
    _
  // Predicated region
  $region6: #{appnp_forward.2} parent=0 // pred_check
    _
  $region7: #{appnp_forward.2} parent=0 // pred_check_branch
    %13 = sbr.rel (0) target = $region9
  $region8: #{appnp_forward.2} parent=0 // pred_region
    _
  $region9: #{appnp_forward.2} parent=0 // pred_fallthru
    _
  // Predicated region
  $region10: #{appnp_forward.2} parent=0 // pred_check
    _
  $region11: #{appnp_forward.2} parent=0 // pred_check_branch
    %15 = sbr.rel (0) target = $region13
  $region12: #{appnp_forward.2} parent=0 // pred_region
    _
  $region13: #{appnp_forward.2} parent=0 // pred_fallthru
    _
  // Predicated region
  $region14: #{appnp_forward.2} parent=0 // pred_check
    _
  $region15: #{appnp_forward.2} parent=0 // pred_check_branch
    %17 = sbr.rel (0) target = $region17
  $region16: #{appnp_forward.2} parent=0 // pred_region
    _
  $region17: #{appnp_forward.2} parent=0 // pred_fallthru
    _
  // Predicated region
  $region18: #{appnp_forward.2} parent=0 // pred_check
    _
  $region19: #{appnp_forward.2} parent=0 // pred_check_branch
    %19 = sbr.rel (0) target = $region21
  $region20: #{appnp_forward.2} parent=0 // pred_region
    _
  $region21: #{appnp_forward.2} parent=0 // pred_fallthru
    _
  %v20 = vld [vmem:[%s0] sm:$0xff]
  %v21 = vld [vmem:[%s0 + $0x8] sm:$0xff]
  %v22 = vld [vmem:[%s0 + $0x10] sm:$0xff]
  %v23 = vld [vmem:[%s0 + $0x18] sm:$0xff]
  %v24 = vld [vmem:[%s0 + $0x20] sm:$0xff]
  %v25 = vld [vmem:[%s0 + $0x28] sm:$0xff]
  %v26 = vld [vmem:[%s0 + $0x30] sm:$0xff]
  %v27 = vld [vmem:[%s0 + $0x38] sm:$0xff]
  %v28 = vld [vmem:[%s0 + $0x40] sm:$0xff]
  %v29 = vld [vmem:[%s0 + $0x48] sm:$0xff]
  %v30 = vld [vmem:[%s0 + $0x50] sm:$0xff]
  %v31 = vld [vmem:[%s0 + $0x58] sm:$0xff]
  %v32 = vld [vmem:[%s0 + $0x60] sm:$0xff]
  %v33 = vld [vmem:[%s0 + $0x68] sm:$0xff]
  %v34 = vld [vmem:[%s0 + $0x70] sm:$0xff]
  %v35 = vld [vmem:[%s0 + $0x78] sm:$0xff]
  %v36 = vld [vmem:[%s0 + $0x80] sm:$0xff]
  %v37 = vld [vmem:[%s0 + $0x88] sm:$0xff]
  %v38 = vld [vmem:[%s0 + $0x90] sm:$0xff]
  %v39 = vld [vmem:[%s0 + $0x98] sm:$0xff]
  %v40 = vld [vmem:[%s0 + $0xa0] sm:$0xff]
  %v41 = vld [vmem:[%s0 + $0xa8] sm:$0xff]
  %v42 = vld [vmem:[%s0 + $0xb0] sm:$0xff]
  %v43 = vld [vmem:[%s0 + $0xb8] sm:$0xff]
  %v44 = vld [vmem:[%s0 + $0xc0] sm:$0xff]
  %v45 = vld [vmem:[%s0 + $0xc8] sm:$0xff]
  %v46 = vld [vmem:[%s0 + $0xd0] sm:$0xff]
  %v47 = vld [vmem:[%s0 + $0xd8] sm:$0xff]
  %v48 = vld [vmem:[%s0 + $0xe0] sm:$0xff]
  %v49 = vld [vmem:[%s0 + $0xe8] sm:$0xff]
  %v50 = vld [vmem:[%s0 + $0xf0] sm:$0xff]
  %v51 = vld [vmem:[%s0 + $0xf8] sm:$0xff]
  %v52 = vld [vmem:[%s1] sm:$0xff]
  %v53 = vld [vmem:[%s1 + $0x8] sm:$0xff]
  %v54 = vld [vmem:[%s1 + $0x10] sm:$0xff]
  %v55 = vld [vmem:[%s1 + $0x18] sm:$0xff]
  %v56 = vld [vmem:[%s2] sm:$0x1]
  %v58 = vlaneseq
  %v59 = vshrl.u32 %v58, 7
  %v60 = vsub.s32 0, %v59
  %v61 = vrot.slane %v56, %v60
  %vm63 = vcmask 261120
  %v65 = vsel %vm63, %v20, 0
  %v68 = vsel %vm63, %v21, 0
  %v71 = vsel %vm63, %v22, 0
  %v74 = vsel %vm63, %v23, 0
  %v77 = vsel %vm63, %v24, 0
  %v80 = vsel %vm63, %v25, 0
  %v83 = vsel %vm63, %v26, 0
  %v86 = vsel %vm63, %v27, 0
  %v89 = vsel %vm63, %v28, 0
  %v92 = vsel %vm63, %v29, 0
  %v95 = vsel %vm63, %v30, 0
  %v98 = vsel %vm63, %v31, 0
  %v101 = vsel %vm63, %v32, 0
  %v104 = vsel %vm63, %v33, 0
  %v107 = vsel %vm63, %v34, 0
  %v110 = vsel %vm63, %v35, 0
  %v113 = vsel %vm63, %v36, 0
  %v116 = vsel %vm63, %v37, 0
  %v119 = vsel %vm63, %v38, 0
  %v122 = vsel %vm63, %v39, 0
  %v125 = vsel %vm63, %v40, 0
  %v128 = vsel %vm63, %v41, 0
  %v131 = vsel %vm63, %v42, 0
  %v134 = vsel %vm63, %v43, 0
  %v137 = vsel %vm63, %v44, 0
  %v140 = vsel %vm63, %v45, 0
  %v143 = vsel %vm63, %v46, 0
  %v146 = vsel %vm63, %v47, 0
  %v149 = vsel %vm63, %v48, 0
  %v152 = vsel %vm63, %v49, 0
  %v155 = vsel %vm63, %v50, 0
  %v158 = vsel %vm63, %v51, 0
  %160 = vmatprep.subr.mxu0 0.0
  %161 = vmatpush1.msra.mxu0 %v52
  %162 = vmatprep.subr.mxu0 0.0
  %163 = vmatpush1.msra.mxu0 %v53
  %164 = vmatprep.subr.mxu0 0.0
  %165 = vmatpush1.msra.mxu0 %v54
  %166 = vmatprep.subr.mxu0 0.0
  %167 = vmatpush1.msra.mxu0 %v55
  %168 = vmatprep.subr.mxu0 0.0
  %169 = vmatpush1.msra.mxu0 0.0
  %170 = vmatprep.subr.mxu0 0.0
  %171 = vmatpush1.msra.mxu0 0.0
  %172 = vmatprep.subr.mxu0 0.0
  %173 = vmatpush1.msra.mxu0 0.0
  %174 = vmatprep.subr.mxu0 0.0
  %175 = vmatpush1.msra.mxu0 0.0
  %176 = vmatprep.subr.mxu0 0.0
  %177 = vmatpush1.msra.mxu0 0.0
  %178 = vmatprep.subr.mxu0 0.0
  %179 = vmatpush1.msra.mxu0 0.0
  %180 = vmatprep.subr.mxu0 0.0
  %181 = vmatpush1.msra.mxu0 0.0
  %182 = vmatprep.subr.mxu0 0.0
  %183 = vmatpush1.msra.mxu0 0.0
  %184 = vmatprep.subr.mxu0 0.0
  %185 = vmatpush1.msra.mxu0 0.0
  %186 = vmatprep.subr.mxu0 0.0
  %187 = vmatpush1.msra.mxu0 0.0
  %188 = vmatprep.subr.mxu0 0.0
  %189 = vmatpush1.msra.mxu0 0.0
  %190 = vmatprep.subr.mxu0 0.0
  %191 = vmatpush1.msra.mxu0 0.0
  %192 = vmatprep.subr.mxu0 0.0
  %193 = vmatpush1.msra.mxu0 0.0
  %194 = vmatprep.subr.mxu0 0.0
  %195 = vmatpush1.msra.mxu0 0.0
  %196 = vmatprep.subr.mxu0 0.0
  %197 = vmatpush1.msra.mxu0 0.0
  %198 = vmatprep.subr.mxu0 0.0
  %199 = vmatpush1.msra.mxu0 0.0
  %200 = vmatprep.subr.mxu0 0.0
  %201 = vmatpush1.msra.mxu0 0.0
  %202 = vmatprep.subr.mxu0 0.0
  %203 = vmatpush1.msra.mxu0 0.0
  %204 = vmatprep.subr.mxu0 0.0
  %205 = vmatpush1.msra.mxu0 0.0
  %206 = vmatprep.subr.mxu0 0.0
  %207 = vmatpush1.msra.mxu0 0.0
  %208 = vmatprep.subr.mxu0 0.0
  %209 = vmatpush1.msra.mxu0 0.0
  %210 = vmatprep.subr.mxu0 0.0
  %211 = vmatpush1.msra.mxu0 0.0
  %212 = vmatprep.subr.mxu0 0.0
  %213 = vmatpush1.msra.mxu0 0.0
  %214 = vmatprep.subr.mxu0 0.0
  %215 = vmatpush1.msra.mxu0 0.0
  %216 = vmatprep.subr.mxu0 0.0
  %217 = vmatpush1.msra.mxu0 0.0
  %218 = vmatprep.subr.mxu0 0.0
  %219 = vmatpush1.msra.mxu0 0.0
  %220 = vmatprep.subr.mxu0 0.0
  %221 = vmatpush1.msra.mxu0 0.0
  %222 = vmatprep.subr.mxu0 0.0
  %223 = vmatpush1.msra.mxu0 0.0
  %224 = vmatprep.mubr.f32.mxu0 0.0
  %225 = vmatmul.mubr.f32.gmra.mrb[0].mxu0 %v65
  %v226 = vpop.f32.mrb[0].mxu0
  %v227 = vadd.f32 %v61, %v226
  %v228 = vpop.f32.mrb[0].mxu0
  %229 = vmatprep.mubr.f32.mxu0 0.0
  %230 = vmatmul.mubr.f32.gmra.mrb[0].mxu0 %v68
  %v231 = vpop.f32.mrb[0].mxu0
  %v232 = vadd.f32 %v61, %v231
  %v233 = vpop.f32.mrb[0].mxu0
  %234 = vmatprep.mubr.f32.mxu0 0.0
  %235 = vmatmul.mubr.f32.gmra.mrb[0].mxu0 %v71
  %v236 = vpop.f32.mrb[0].mxu0
  %v237 = vadd.f32 %v61, %v236
  %v238 = vpop.f32.mrb[0].mxu0
  %239 = vmatprep.mubr.f32.mxu0 0.0
  %240 = vmatmul.mubr.f32.gmra.mrb[0].mxu0 %v74
  %v241 = vpop.f32.mrb[0].mxu0
  %v242 = vadd.f32 %v61, %v241
  %v243 = vpop.f32.mrb[0].mxu0
  %244 = vmatprep.mubr.f32.mxu0 0.0
  %245 = vmatmul.mubr.f32.gmra.mrb[0].mxu0 %v77
  %v246 = vpop.f32.mrb[0].mxu0
  %v247 = vadd.f32 %v61, %v246
  %v248 = vpop.f32.mrb[0].mxu0
  %249 = vmatprep.mubr.f32.mxu0 0.0
  %250 = vmatmul.mubr.f32.gmra.mrb[0].mxu0 %v80
  %v251 = vpop.f32.mrb[0].mxu0
  %v252 = vadd.f32 %v61, %v251
  %v253 = vpop.f32.mrb[0].mxu0
  %254 = vmatprep.mubr.f32.mxu0 0.0
  %255 = vmatmul.mubr.f32.gmra.mrb[0].mxu0 %v83
  %v256 = vpop.f32.mrb[0].mxu0
  %v257 = vadd.f32 %v61, %v256
  %v258 = vpop.f32.mrb[0].mxu0
  %259 = vmatprep.mubr.f32.mxu0 0.0
  %260 = vmatmul.mubr.f32.gmra.mrb[0].mxu0 %v86
  %v261 = vpop.f32.mrb[0].mxu0
  %v262 = vadd.f32 %v61, %v261
  %v263 = vpop.f32.mrb[0].mxu0
  %264 = vmatprep.mubr.f32.mxu0 0.0
  %265 = vmatmul.mubr.f32.gmra.mrb[0].mxu0 %v89
  %v266 = vpop.f32.mrb[0].mxu0
  %v267 = vadd.f32 %v61, %v266
  %v268 = vpop.f32.mrb[0].mxu0
  %269 = vmatprep.mubr.f32.mxu0 0.0
  %270 = vmatmul.mubr.f32.gmra.mrb[0].mxu0 %v92
  %v271 = vpop.f32.mrb[0].mxu0
  %v272 = vadd.f32 %v61, %v271
  %v273 = vpop.f32.mrb[0].mxu0
  %274 = vmatprep.mubr.f32.mxu0 0.0
  %275 = vmatmul.mubr.f32.gmra.mrb[0].mxu0 %v95
  %v276 = vpop.f32.mrb[0].mxu0
  %v277 = vadd.f32 %v61, %v276
  %v278 = vpop.f32.mrb[0].mxu0
  %279 = vmatprep.mubr.f32.mxu0 0.0
  %280 = vmatmul.mubr.f32.gmra.mrb[0].mxu0 %v98
  %v281 = vpop.f32.mrb[0].mxu0
  %v282 = vadd.f32 %v61, %v281
  %v283 = vpop.f32.mrb[0].mxu0
  %284 = vmatprep.mubr.f32.mxu0 0.0
  %285 = vmatmul.mubr.f32.gmra.mrb[0].mxu0 %v101
  %v286 = vpop.f32.mrb[0].mxu0
  %v287 = vadd.f32 %v61, %v286
  %v288 = vpop.f32.mrb[0].mxu0
  %289 = vmatprep.mubr.f32.mxu0 0.0
  %290 = vmatmul.mubr.f32.gmra.mrb[0].mxu0 %v104
  %v291 = vpop.f32.mrb[0].mxu0
  %v292 = vadd.f32 %v61, %v291
  %v293 = vpop.f32.mrb[0].mxu0
  %294 = vmatprep.mubr.f32.mxu0 0.0
  %295 = vmatmul.mubr.f32.gmra.mrb[0].mxu0 %v107
  %v296 = vpop.f32.mrb[0].mxu0
  %v297 = vadd.f32 %v61, %v296
  %v298 = vpop.f32.mrb[0].mxu0
  %299 = vmatprep.mubr.f32.mxu0 0.0
  %300 = vmatmul.mubr.f32.gmra.mrb[0].mxu0 %v110
  %v301 = vpop.f32.mrb[0].mxu0
  %v302 = vadd.f32 %v61, %v301
  %v303 = vpop.f32.mrb[0].mxu0
  %304 = vmatprep.mubr.f32.mxu0 0.0
  %305 = vmatmul.mubr.f32.gmra.mrb[0].mxu0 %v113
  %v306 = vpop.f32.mrb[0].mxu0
  %v307 = vadd.f32 %v61, %v306
  %v308 = vpop.f32.mrb[0].mxu0
  %309 = vmatprep.mubr.f32.mxu0 0.0
  %310 = vmatmul.mubr.f32.gmra.mrb[0].mxu0 %v116
  %v311 = vpop.f32.mrb[0].mxu0
  %v312 = vadd.f32 %v61, %v311
  %v313 = vpop.f32.mrb[0].mxu0
  %314 = vmatprep.mubr.f32.mxu0 0.0
  %315 = vmatmul.mubr.f32.gmra.mrb[0].mxu0 %v119
  %v316 = vpop.f32.mrb[0].mxu0
  %v317 = vadd.f32 %v61, %v316
  %v318 = vpop.f32.mrb[0].mxu0
  %319 = vmatprep.mubr.f32.mxu0 0.0
  %320 = vmatmul.mubr.f32.gmra.mrb[0].mxu0 %v122
  %v321 = vpop.f32.mrb[0].mxu0
  %v322 = vadd.f32 %v61, %v321
  %v323 = vpop.f32.mrb[0].mxu0
  %324 = vmatprep.mubr.f32.mxu0 0.0
  %325 = vmatmul.mubr.f32.gmra.mrb[0].mxu0 %v125
  %v326 = vpop.f32.mrb[0].mxu0
  %v327 = vadd.f32 %v61, %v326
  %v328 = vpop.f32.mrb[0].mxu0
  %329 = vmatprep.mubr.f32.mxu0 0.0
  %330 = vmatmul.mubr.f32.gmra.mrb[0].mxu0 %v128
  %v331 = vpop.f32.mrb[0].mxu0
  %v332 = vadd.f32 %v61, %v331
  %v333 = vpop.f32.mrb[0].mxu0
  %334 = vmatprep.mubr.f32.mxu0 0.0
  %335 = vmatmul.mubr.f32.gmra.mrb[0].mxu0 %v131
  %v336 = vpop.f32.mrb[0].mxu0
  %v337 = vadd.f32 %v61, %v336
  %v338 = vpop.f32.mrb[0].mxu0
  %339 = vmatprep.mubr.f32.mxu0 0.0
  %340 = vmatmul.mubr.f32.gmra.mrb[0].mxu0 %v134
  %v341 = vpop.f32.mrb[0].mxu0
  %v342 = vadd.f32 %v61, %v341
  %v343 = vpop.f32.mrb[0].mxu0
  %344 = vmatprep.mubr.f32.mxu0 0.0
  %345 = vmatmul.mubr.f32.gmra.mrb[0].mxu0 %v137
  %v346 = vpop.f32.mrb[0].mxu0
  %v347 = vadd.f32 %v61, %v346
  %v348 = vpop.f32.mrb[0].mxu0
  %349 = vmatprep.mubr.f32.mxu0 0.0
  %350 = vmatmul.mubr.f32.gmra.mrb[0].mxu0 %v140
  %v351 = vpop.f32.mrb[0].mxu0
  %v352 = vadd.f32 %v61, %v351
  %v353 = vpop.f32.mrb[0].mxu0
  %354 = vmatprep.mubr.f32.mxu0 0.0
  %355 = vmatmul.mubr.f32.gmra.mrb[0].mxu0 %v143
  %v356 = vpop.f32.mrb[0].mxu0
  %v357 = vadd.f32 %v61, %v356
  %v358 = vpop.f32.mrb[0].mxu0
  %359 = vmatprep.mubr.f32.mxu0 0.0
  %360 = vmatmul.mubr.f32.gmra.mrb[0].mxu0 %v146
  %v361 = vpop.f32.mrb[0].mxu0
  %v362 = vadd.f32 %v61, %v361
  %v363 = vpop.f32.mrb[0].mxu0
  %364 = vmatprep.mubr.f32.mxu0 0.0
  %365 = vmatmul.mubr.f32.gmra.mrb[0].mxu0 %v149
  %v366 = vpop.f32.mrb[0].mxu0
  %v367 = vadd.f32 %v61, %v366
  %v368 = vpop.f32.mrb[0].mxu0
  %369 = vmatprep.mubr.f32.mxu0 0.0
  %370 = vmatmul.mubr.f32.gmra.mrb[0].mxu0 %v152
  %v371 = vpop.f32.mrb[0].mxu0
  %v372 = vadd.f32 %v61, %v371
  %v373 = vpop.f32.mrb[0].mxu0
  %374 = vmatprep.mubr.f32.mxu0 0.0
  %375 = vmatmul.mubr.f32.gmra.mrb[0].mxu0 %v155
  %v376 = vpop.f32.mrb[0].mxu0
  %v377 = vadd.f32 %v61, %v376
  %v378 = vpop.f32.mrb[0].mxu0
  %379 = vmatprep.mubr.f32.mxu0 0.0
  %380 = vmatmul.mubr.f32.gmra.mrb[0].mxu0 %v158
  %v381 = vpop.f32.mrb[0].mxu0
  %v382 = vadd.f32 %v61, %v381
  %v383 = vpop.f32.mrb[0].mxu0
  %384 = vdwg.mxu0
  %v385 = vmax.f32 %v227, 0.0
  %v386 = vmax.f32 %v232, 0.0
  %v387 = vmax.f32 %v237, 0.0
  %v388 = vmax.f32 %v242, 0.0
  %v389 = vmax.f32 %v247, 0.0
  %v390 = vmax.f32 %v252, 0.0
  %v391 = vmax.f32 %v257, 0.0
  %v392 = vmax.f32 %v262, 0.0
  %v393 = vmax.f32 %v267, 0.0
  %v394 = vmax.f32 %v272, 0.0
  %v395 = vmax.f32 %v277, 0.0
  %v396 = vmax.f32 %v282, 0.0
  %v397 = vmax.f32 %v287, 0.0
  %v398 = vmax.f32 %v292, 0.0
  %v399 = vmax.f32 %v297, 0.0
  %v400 = vmax.f32 %v302, 0.0
  %v401 = vmax.f32 %v307, 0.0
  %v402 = vmax.f32 %v312, 0.0
  %v403 = vmax.f32 %v317, 0.0
  %v404 = vmax.f32 %v322, 0.0
  %v405 = vmax.f32 %v327, 0.0
  %v406 = vmax.f32 %v332, 0.0
  %v407 = vmax.f32 %v337, 0.0
  %v408 = vmax.f32 %v342, 0.0
  %v409 = vmax.f32 %v347, 0.0
  %v410 = vmax.f32 %v352, 0.0
  %v411 = vmax.f32 %v357, 0.0
  %v412 = vmax.f32 %v362, 0.0
  %v413 = vmax.f32 %v367, 0.0
  %v414 = vmax.f32 %v372, 0.0
  %v415 = vmax.f32 %v377, 0.0
  %v416 = vmax.f32 %v382, 0.0
  %v417 = vld [vmem:[%s3] sm:$0xff]
  %v418 = vld [vmem:[%s3 + $0x8] sm:$0xff]
  %v419 = vld [vmem:[%s3 + $0x10] sm:$0xff]
  %v420 = vld [vmem:[%s3 + $0x18] sm:$0xff]
  %v421 = vld [vmem:[%s3 + $0x20] sm:$0xff]
  %v422 = vld [vmem:[%s3 + $0x28] sm:$0xff]
  %v423 = vld [vmem:[%s3 + $0x30] sm:$0xff]
  %v424 = vld [vmem:[%s3 + $0x38] sm:$0xff]
  %v425 = vld [vmem:[%s4] sm:$0x1]
  %v427 = vlaneseq
  %v428 = vshrl.u32 %v427, 7
  %v429 = vsub.s32 0, %v428
  %v430 = vrot.slane %v425, %v429
  %vm432 = vcmask 523264
  %v434 = vsel %vm432, %v385, 0
  %v437 = vsel %vm432, %v386, 0
  %v440 = vsel %vm432, %v387, 0
  %v443 = vsel %vm432, %v388, 0
  %v446 = vsel %vm432, %v389, 0
  %v449 = vsel %vm432, %v390, 0
  %v452 = vsel %vm432, %v391, 0
  %v455 = vsel %vm432, %v392, 0
  %v458 = vsel %vm432, %v393, 0
  %v461 = vsel %vm432, %v394, 0
  %v464 = vsel %vm432, %v395, 0
  %v467 = vsel %vm432, %v396, 0
  %v470 = vsel %vm432, %v397, 0
  %v473 = vsel %vm432, %v398, 0
  %v476 = vsel %vm432, %v399, 0
  %v479 = vsel %vm432, %v400, 0
  %v482 = vsel %vm432, %v401, 0
  %v485 = vsel %vm432, %v402, 0
  %v488 = vsel %vm432, %v403, 0
  %v491 = vsel %vm432, %v404, 0
  %v494 = vsel %vm432, %v405, 0
  %v497 = vsel %vm432, %v406, 0
  %v500 = vsel %vm432, %v407, 0
  %v503 = vsel %vm432, %v408, 0
  %v506 = vsel %vm432, %v409, 0
  %v509 = vsel %vm432, %v410, 0
  %v512 = vsel %vm432, %v411, 0
  %v515 = vsel %vm432, %v412, 0
  %v518 = vsel %vm432, %v413, 0
  %v521 = vsel %vm432, %v414, 0
  %v524 = vsel %vm432, %v415, 0
  %v527 = vsel %vm432, %v416, 0
  %529 = vmatprep.subr.mxu0 0.0
  %530 = vmatpush1.msra.mxu0 %v417
  %531 = vmatprep.subr.mxu0 0.0
  %532 = vmatpush1.msra.mxu0 %v418
  %533 = vmatprep.subr.mxu0 0.0
  %534 = vmatpush1.msra.mxu0 %v419
  %535 = vmatprep.subr.mxu0 0.0
  %536 = vmatpush1.msra.mxu0 %v420
  %537 = vmatprep.subr.mxu0 0.0
  %538 = vmatpush1.msra.mxu0 %v421
  %539 = vmatprep.subr.mxu0 0.0
  %540 = vmatpush1.msra.mxu0 %v422
  %541 = vmatprep.subr.mxu0 0.0
  %542 = vmatpush1.msra.mxu0 %v423
  %543 = vmatprep.subr.mxu0 0.0
  %544 = vmatpush1.msra.mxu0 %v424
  %545 = vmatprep.subr.mxu0 0.0
  %546 = vmatpush1.msra.mxu0 0.0
  %547 = vmatprep.subr.mxu0 0.0
  %548 = vmatpush1.msra.mxu0 0.0
  %549 = vmatprep.subr.mxu0 0.0
  %550 = vmatpush1.msra.mxu0 0.0
  %551 = vmatprep.subr.mxu0 0.0
  %552 = vmatpush1.msra.mxu0 0.0
  %553 = vmatprep.subr.mxu0 0.0
  %554 = vmatpush1.msra.mxu0 0.0
  %555 = vmatprep.subr.mxu0 0.0
  %556 = vmatpush1.msra.mxu0 0.0
  %557 = vmatprep.subr.mxu0 0.0
  %558 = vmatpush1.msra.mxu0 0.0
  %559 = vmatprep.subr.mxu0 0.0
  %560 = vmatpush1.msra.mxu0 0.0
  %561 = vmatprep.subr.mxu0 0.0
  %562 = vmatpush1.msra.mxu0 0.0
  %563 = vmatprep.subr.mxu0 0.0
  %564 = vmatpush1.msra.mxu0 0.0
  %565 = vmatprep.subr.mxu0 0.0
  %566 = vmatpush1.msra.mxu0 0.0
  %567 = vmatprep.subr.mxu0 0.0
  %568 = vmatpush1.msra.mxu0 0.0
  %569 = vmatprep.subr.mxu0 0.0
  %570 = vmatpush1.msra.mxu0 0.0
  %571 = vmatprep.subr.mxu0 0.0
  %572 = vmatpush1.msra.mxu0 0.0
  %573 = vmatprep.subr.mxu0 0.0
  %574 = vmatpush1.msra.mxu0 0.0
  %575 = vmatprep.subr.mxu0 0.0
  %576 = vmatpush1.msra.mxu0 0.0
  %577 = vmatprep.subr.mxu0 0.0
  %578 = vmatpush1.msra.mxu0 0.0
  %579 = vmatprep.subr.mxu0 0.0
  %580 = vmatpush1.msra.mxu0 0.0
  %581 = vmatprep.subr.mxu0 0.0
  %582 = vmatpush1.msra.mxu0 0.0
  %583 = vmatprep.subr.mxu0 0.0
  %584 = vmatpush1.msra.mxu0 0.0
  %585 = vmatprep.subr.mxu0 0.0
  %586 = vmatpush1.msra.mxu0 0.0
  %587 = vmatprep.subr.mxu0 0.0
  %588 = vmatpush1.msra.mxu0 0.0
  %589 = vmatprep.subr.mxu0 0.0
  %590 = vmatpush1.msra.mxu0 0.0
  %591 = vmatprep.subr.mxu0 0.0
  %592 = vmatpush1.msra.mxu0 0.0
  %593 = vmatprep.mubr.f32.mxu0 0.0
  %594 = vmatmul.mubr.f32.gmra.mrb[0].mxu0 %v434
  %v595 = vpop.f32.mrb[0].mxu0
  %v596 = vadd.f32 %v430, %v595
  %v597 = vpop.f32.mrb[0].mxu0
  %598 = vmatprep.mubr.f32.mxu0 0.0
  %599 = vmatmul.mubr.f32.gmra.mrb[0].mxu0 %v437
  %v600 = vpop.f32.mrb[0].mxu0
  %v601 = vadd.f32 %v430, %v600
  %v602 = vpop.f32.mrb[0].mxu0
  %603 = vmatprep.mubr.f32.mxu0 0.0
  %604 = vmatmul.mubr.f32.gmra.mrb[0].mxu0 %v440
  %v605 = vpop.f32.mrb[0].mxu0
  %v606 = vadd.f32 %v430, %v605
  %v607 = vpop.f32.mrb[0].mxu0
  %608 = vmatprep.mubr.f32.mxu0 0.0
  %609 = vmatmul.mubr.f32.gmra.mrb[0].mxu0 %v443
  %v610 = vpop.f32.mrb[0].mxu0
  %v611 = vadd.f32 %v430, %v610
  %v612 = vpop.f32.mrb[0].mxu0
  %613 = vmatprep.mubr.f32.mxu0 0.0
  %614 = vmatmul.mubr.f32.gmra.mrb[0].mxu0 %v446
  %v615 = vpop.f32.mrb[0].mxu0
  %v616 = vadd.f32 %v430, %v615
  %v617 = vpop.f32.mrb[0].mxu0
  %618 = vmatprep.mubr.f32.mxu0 0.0
  %619 = vmatmul.mubr.f32.gmra.mrb[0].mxu0 %v449
  %v620 = vpop.f32.mrb[0].mxu0
  %v621 = vadd.f32 %v430, %v620
  %v622 = vpop.f32.mrb[0].mxu0
  %623 = vmatprep.mubr.f32.mxu0 0.0
  %624 = vmatmul.mubr.f32.gmra.mrb[0].mxu0 %v452
  %v625 = vpop.f32.mrb[0].mxu0
  %v626 = vadd.f32 %v430, %v625
  %v627 = vpop.f32.mrb[0].mxu0
  %628 = vmatprep.mubr.f32.mxu0 0.0
  %629 = vmatmul.mubr.f32.gmra.mrb[0].mxu0 %v455
  %v630 = vpop.f32.mrb[0].mxu0
  %v631 = vadd.f32 %v430, %v630
  %v632 = vpop.f32.mrb[0].mxu0
  %633 = vmatprep.mubr.f32.mxu0 0.0
  %634 = vmatmul.mubr.f32.gmra.mrb[0].mxu0 %v458
  %v635 = vpop.f32.mrb[0].mxu0
  %v636 = vadd.f32 %v430, %v635
  %v637 = vpop.f32.mrb[0].mxu0
  %638 = vmatprep.mubr.f32.mxu0 0.0
  %639 = vmatmul.mubr.f32.gmra.mrb[0].mxu0 %v461
  %v640 = vpop.f32.mrb[0].mxu0
  %v641 = vadd.f32 %v430, %v640
  %v642 = vpop.f32.mrb[0].mxu0
  %643 = vmatprep.mubr.f32.mxu0 0.0
  %644 = vmatmul.mubr.f32.gmra.mrb[0].mxu0 %v464
  %v645 = vpop.f32.mrb[0].mxu0
  %v646 = vadd.f32 %v430, %v645
  %v647 = vpop.f32.mrb[0].mxu0
  %648 = vmatprep.mubr.f32.mxu0 0.0
  %649 = vmatmul.mubr.f32.gmra.mrb[0].mxu0 %v467
  %v650 = vpop.f32.mrb[0].mxu0
  %v651 = vadd.f32 %v430, %v650
  %v652 = vpop.f32.mrb[0].mxu0
  %653 = vmatprep.mubr.f32.mxu0 0.0
  %654 = vmatmul.mubr.f32.gmra.mrb[0].mxu0 %v470
  %v655 = vpop.f32.mrb[0].mxu0
  %v656 = vadd.f32 %v430, %v655
  %v657 = vpop.f32.mrb[0].mxu0
  %658 = vmatprep.mubr.f32.mxu0 0.0
  %659 = vmatmul.mubr.f32.gmra.mrb[0].mxu0 %v473
  %v660 = vpop.f32.mrb[0].mxu0
  %v661 = vadd.f32 %v430, %v660
  %v662 = vpop.f32.mrb[0].mxu0
  %663 = vmatprep.mubr.f32.mxu0 0.0
  %664 = vmatmul.mubr.f32.gmra.mrb[0].mxu0 %v476
  %v665 = vpop.f32.mrb[0].mxu0
  %v666 = vadd.f32 %v430, %v665
  %v667 = vpop.f32.mrb[0].mxu0
  %668 = vmatprep.mubr.f32.mxu0 0.0
  %669 = vmatmul.mubr.f32.gmra.mrb[0].mxu0 %v479
  %v670 = vpop.f32.mrb[0].mxu0
  %v671 = vadd.f32 %v430, %v670
  %v672 = vpop.f32.mrb[0].mxu0
  %673 = vmatprep.mubr.f32.mxu0 0.0
  %674 = vmatmul.mubr.f32.gmra.mrb[0].mxu0 %v482
  %v675 = vpop.f32.mrb[0].mxu0
  %v676 = vadd.f32 %v430, %v675
  %v677 = vpop.f32.mrb[0].mxu0
  %678 = vmatprep.mubr.f32.mxu0 0.0
  %679 = vmatmul.mubr.f32.gmra.mrb[0].mxu0 %v485
  %v680 = vpop.f32.mrb[0].mxu0
  %v681 = vadd.f32 %v430, %v680
  %v682 = vpop.f32.mrb[0].mxu0
  %683 = vmatprep.mubr.f32.mxu0 0.0
  %684 = vmatmul.mubr.f32.gmra.mrb[0].mxu0 %v488
  %v685 = vpop.f32.mrb[0].mxu0
  %v686 = vadd.f32 %v430, %v685
  %v687 = vpop.f32.mrb[0].mxu0
  %688 = vmatprep.mubr.f32.mxu0 0.0
  %689 = vmatmul.mubr.f32.gmra.mrb[0].mxu0 %v491
  %v690 = vpop.f32.mrb[0].mxu0
  %v691 = vadd.f32 %v430, %v690
  %v692 = vpop.f32.mrb[0].mxu0
  %693 = vmatprep.mubr.f32.mxu0 0.0
  %694 = vmatmul.mubr.f32.gmra.mrb[0].mxu0 %v494
  %v695 = vpop.f32.mrb[0].mxu0
  %v696 = vadd.f32 %v430, %v695
  %v697 = vpop.f32.mrb[0].mxu0
  %698 = vmatprep.mubr.f32.mxu0 0.0
  %699 = vmatmul.mubr.f32.gmra.mrb[0].mxu0 %v497
  %v700 = vpop.f32.mrb[0].mxu0
  %v701 = vadd.f32 %v430, %v700
  %v702 = vpop.f32.mrb[0].mxu0
  %703 = vmatprep.mubr.f32.mxu0 0.0
  %704 = vmatmul.mubr.f32.gmra.mrb[0].mxu0 %v500
  %v705 = vpop.f32.mrb[0].mxu0
  %v706 = vadd.f32 %v430, %v705
  %v707 = vpop.f32.mrb[0].mxu0
  %708 = vmatprep.mubr.f32.mxu0 0.0
  %709 = vmatmul.mubr.f32.gmra.mrb[0].mxu0 %v503
  %v710 = vpop.f32.mrb[0].mxu0
  %v711 = vadd.f32 %v430, %v710
  %v712 = vpop.f32.mrb[0].mxu0
  %713 = vmatprep.mubr.f32.mxu0 0.0
  %714 = vmatmul.mubr.f32.gmra.mrb[0].mxu0 %v506
  %v715 = vpop.f32.mrb[0].mxu0
  %v716 = vadd.f32 %v430, %v715
  %v717 = vpop.f32.mrb[0].mxu0
  %718 = vmatprep.mubr.f32.mxu0 0.0
  %719 = vmatmul.mubr.f32.gmra.mrb[0].mxu0 %v509
  %v720 = vpop.f32.mrb[0].mxu0
  %v721 = vadd.f32 %v430, %v720
  %v722 = vpop.f32.mrb[0].mxu0
  %723 = vmatprep.mubr.f32.mxu0 0.0
  %724 = vmatmul.mubr.f32.gmra.mrb[0].mxu0 %v512
  %v725 = vpop.f32.mrb[0].mxu0
  %v726 = vadd.f32 %v430, %v725
  %v727 = vpop.f32.mrb[0].mxu0
  %728 = vmatprep.mubr.f32.mxu0 0.0
  %729 = vmatmul.mubr.f32.gmra.mrb[0].mxu0 %v515
  %v730 = vpop.f32.mrb[0].mxu0
  %v731 = vadd.f32 %v430, %v730
  %v732 = vpop.f32.mrb[0].mxu0
  %733 = vmatprep.mubr.f32.mxu0 0.0
  %734 = vmatmul.mubr.f32.gmra.mrb[0].mxu0 %v518
  %v735 = vpop.f32.mrb[0].mxu0
  %v736 = vadd.f32 %v430, %v735
  %v737 = vpop.f32.mrb[0].mxu0
  %738 = vmatprep.mubr.f32.mxu0 0.0
  %739 = vmatmul.mubr.f32.gmra.mrb[0].mxu0 %v521
  %v740 = vpop.f32.mrb[0].mxu0
  %v741 = vadd.f32 %v430, %v740
  %v742 = vpop.f32.mrb[0].mxu0
  %743 = vmatprep.mubr.f32.mxu0 0.0
  %744 = vmatmul.mubr.f32.gmra.mrb[0].mxu0 %v524
  %v745 = vpop.f32.mrb[0].mxu0
  %v746 = vadd.f32 %v430, %v745
  %v747 = vpop.f32.mrb[0].mxu0
  %748 = vmatprep.mubr.f32.mxu0 0.0
  %749 = vmatmul.mubr.f32.gmra.mrb[0].mxu0 %v527
  %v750 = vpop.f32.mrb[0].mxu0
  %v751 = vadd.f32 %v430, %v750
  %v752 = vpop.f32.mrb[0].mxu0
  %753 = vdwg.mxu0
  %754 = vst [vmem:[%s5] sm:$0xff] %v596
  %755 = vst [vmem:[%s5 + $0x8] sm:$0xff] %v601
  %756 = vst [vmem:[%s5 + $0x10] sm:$0xff] %v606
  %757 = vst [vmem:[%s5 + $0x18] sm:$0xff] %v611
  %758 = vst [vmem:[%s5 + $0x20] sm:$0xff] %v616
  %759 = vst [vmem:[%s5 + $0x28] sm:$0xff] %v621
  %760 = vst [vmem:[%s5 + $0x30] sm:$0xff] %v626
  %761 = vst [vmem:[%s5 + $0x38] sm:$0xff] %v631
  %762 = vst [vmem:[%s5 + $0x40] sm:$0xff] %v636
  %763 = vst [vmem:[%s5 + $0x48] sm:$0xff] %v641
  %764 = vst [vmem:[%s5 + $0x50] sm:$0xff] %v646
  %765 = vst [vmem:[%s5 + $0x58] sm:$0xff] %v651
  %766 = vst [vmem:[%s5 + $0x60] sm:$0xff] %v656
  %767 = vst [vmem:[%s5 + $0x68] sm:$0xff] %v661
  %768 = vst [vmem:[%s5 + $0x70] sm:$0xff] %v666
  %769 = vst [vmem:[%s5 + $0x78] sm:$0xff] %v671
  %770 = vst [vmem:[%s5 + $0x80] sm:$0xff] %v676
  %771 = vst [vmem:[%s5 + $0x88] sm:$0xff] %v681
  %772 = vst [vmem:[%s5 + $0x90] sm:$0xff] %v686
  %773 = vst [vmem:[%s5 + $0x98] sm:$0xff] %v691
  %774 = vst [vmem:[%s5 + $0xa0] sm:$0xff] %v696
  %775 = vst [vmem:[%s5 + $0xa8] sm:$0xff] %v701
  %776 = vst [vmem:[%s5 + $0xb0] sm:$0xff] %v706
  %777 = vst [vmem:[%s5 + $0xb8] sm:$0xff] %v711
  %778 = vst [vmem:[%s5 + $0xc0] sm:$0xff] %v716
  %779 = vst [vmem:[%s5 + $0xc8] sm:$0xff] %v721
  %780 = vst [vmem:[%s5 + $0xd0] sm:$0xff] %v726
  %781 = vst [vmem:[%s5 + $0xd8] sm:$0xff] %v731
  %782 = vst [vmem:[%s5 + $0xe0] sm:$0xff] %v736
  %783 = vst [vmem:[%s5 + $0xe8] sm:$0xff] %v741
  %784 = vst [vmem:[%s5 + $0xf0] sm:$0xff] %v746
  %785 = vst [vmem:[%s5 + $0xf8] sm:$0xff] %v751
  // Predicated region
  $region22: #{appnp_forward.2} parent=0 // pred_check
    _
  $region23: #{appnp_forward.2} parent=0 // pred_check_branch
    %787 = sbr.rel (0) target = $region25
  $region24: #{appnp_forward.2} parent=0 // pred_region
    _
  $region25: #{appnp_forward.2} parent=0 // pred_fallthru
    _
  // Predicated region
  $region26: #{appnp_forward.2} parent=0 // pred_check
    _
  $region27: #{appnp_forward.2} parent=0 // pred_check_branch
    %789 = sbr.rel (0) target = $region29
  $region28: #{appnp_forward.2} parent=0 // pred_region
    _
  $region29: #{appnp_forward.2} parent=0 // pred_fallthru
    _

// kernel: appnp_forward.3
$region0: #{appnp_forward.3}
  #allocation0 [shape = 'u32[]', space=smem, size = 0x4, offset = 0x4, fixed_abs, tag = 'smem constant byte address 0x4 - core index']
  #allocation1 [shape = 'u32[144,128]{1,0:T(1,128)}', space=vmem, size = 0x12000, scoped, tag = 'internal scratch']
  #allocation2 [shape = 'f32[256,128]{1,0:T(8,128)}', space=vmem, size = 0x20000, scoped, tag = 'scratch operand']
  %s0 = inlined_call_operand.vmem [shape: f32[256,128], index: 0, kind: input, shape index: {}]
  %s1 = inlined_call_operand.vmem [shape: f32[256,256], index: 1, kind: input, shape index: {}]
  %s2 = inlined_call_operand.vmem [shape: f32[256,128], index: 2, kind: output, shape index: {}]
  %s3 = sld [smem:[#allocation0]]
  $region53: #{appnp_forward.3} parent=0
    _
  %s5 = ssub.s32 1, %s3
  %s6 = scalar_select 0, %s5, %s3
  loop: start=0, step=1, limit=12
  $region2: #{appnp_forward.3} parent=0 // loop_pre_header
    _
  $region3: #{appnp_forward.3} parent=0 // loop_header
    %s8 = sphi 0, %s12
    %p9 = scmp.ge.s32.totalorder %s8, 12
    %s15 = sphi 0, %s27
    %s16 = sphi 0, %s23
    %s17 = sphi 0, %s15
    %s18 = sphi 0, %s16
    %s19 = sphi 0, %s17
    %s20 = sphi 0, %s18
    %s28 = sphi 0, %s28
    %s30 = sphi 0, %s28
    %s31 = sphi 0, %s30
    %s45 = sphi 0, %s31
    %s51 = sphi 0, %s53
    %s54 = sphi 0, %s51
    %s55 = sphi 0, %s54
    %s71 = sphi 0, %s55
    %s75 = sphi 0, %s75
    %s77 = sphi 0, %s75
    %s78 = sphi 0, %s77
    %s92 = sphi 0, %s78
  $region4: #{appnp_forward.3} parent=0 // loop_header_branch
    %11 = sbr.rel (%p9) target = $region8
  $region5: #{appnp_forward.3} parent=0 // loop_body
    %s13 = ssub.s32 %s8, 1
    %s14 = ssub.s32 %s8, 2
    %s21 = sadd.s32 1, %s16
    %p22 = scmp.ge.s32.totalorder %s21, 1
    %s23 = scalar_select %p22, 0, %s21
    %s24 = sadd.s32 1, %s15
    %s25 = scalar_select %p22, %s24, %s15
    %p26 = scmp.ge.s32.totalorder %s25, 10
    %s27 = scalar_select %p26, 0, %s25
    %s29 = sadd.s32 %s28, 1
    %p32 = scmp.eq.s32.totalorder %s8, 9
    %p33 = scmp.ne.s32.totalorder %s28, %s30
    %p34 = scmp.eq.s32.totalorder %s8, 0
    %p35 = por %p33, %p34
    %p36 = scmp.ne.s32.totalorder %s28, %s30
    %p37 = scmp.eq.s32.totalorder %s13, 9
    %p38 = por %p36, %p37
    %p39 = scmp.ne.s32.totalorder %s30, %s31
    %p40 = scmp.eq.s32.totalorder %s13, 0
    %p41 = por %p39, %p40
    %p42 = scmp.ne.s32.totalorder %s30, %s31
    %p43 = scmp.eq.s32.totalorder %s14, 9
    %p44 = por %p42, %p43
    %p46 = scmp.ne.s32.totalorder %s31, %s45
    %p47 = scmp.eq.s32.totalorder %s14, 0
    %p48 = por %p46, %p47
    %s49 = ssub.s32 %s16, %s23
    %p50 = scmp.eq.s32.totalorder %s49, 0
    %s52 = sadd.s32 %s51, 1
    %s53 = scalar_select %p50, %s51, %s52
    %p56 = pneg %p50
    %p57 = scmp.eq.s32.totalorder %s8, 9
    %p58 = por %p56, %p57
    %p59 = scmp.ne.s32.totalorder %s51, %s54
    %p60 = scmp.eq.s32.totalorder %s8, 0
    %p61 = por %p59, %p60
    %p62 = scmp.ne.s32.totalorder %s51, %s54
    %p63 = scmp.eq.s32.totalorder %s13, 9
    %p64 = por %p62, %p63
    %p65 = scmp.ne.s32.totalorder %s54, %s55
    %p66 = scmp.eq.s32.totalorder %s13, 0
    %p67 = por %p65, %p66
    %p68 = scmp.ne.s32.totalorder %s54, %s55
    %p69 = scmp.eq.s32.totalorder %s14, 9
    %p70 = por %p68, %p69
    %p72 = scmp.ne.s32.totalorder %s55, %s71
    %p73 = scmp.eq.s32.totalorder %s14, 0
    %p74 = por %p72, %p73
    %s76 = sadd.s32 %s75, 1
    %p79 = scmp.eq.s32.totalorder %s8, 9
    %p80 = scmp.ne.s32.totalorder %s75, %s77
    %p81 = scmp.eq.s32.totalorder %s8, 0
    %p82 = por %p80, %p81
    %p83 = scmp.ne.s32.totalorder %s75, %s77
    %p84 = scmp.eq.s32.totalorder %s13, 9
    %p85 = por %p83, %p84
    %p86 = scmp.ne.s32.totalorder %s77, %s78
    %p87 = scmp.eq.s32.totalorder %s13, 0
    %p88 = por %p86, %p87
    %p89 = scmp.ne.s32.totalorder %s77, %s78
    %p90 = scmp.eq.s32.totalorder %s14, 9
    %p91 = por %p89, %p90
    %p93 = scmp.ne.s32.totalorder %s78, %s92
    %p94 = scmp.eq.s32.totalorder %s14, 0
    %p95 = por %p93, %p94
    %p96 = scmp.le.s32.totalorder 1, %s8
    %p97 = scmp.lt.s32.totalorder %s8, 11
    %p98 = pnand %p96, %p97
    %p99 = pneg %p98
    // Predicated region
    $region9: #{appnp_forward.3} parent=5 // pred_check
      _
    $region10: #{appnp_forward.3} parent=5 // pred_check_branch
      %101 = sbr.rel (%p98) target = $region12
    $region11: #{appnp_forward.3} parent=5 // pred_region
      %s102 = ssub.s32 %s8, 1
      // Predicated region
      $region13: #{appnp_forward.3} parent=11 // pred_check
        %p103 = pneg %p41
      $region14: #{appnp_forward.3} parent=11 // pred_check_branch
        %105 = sbr.rel (%p103) target = $region16
      $region15: #{appnp_forward.3} parent=11 // pred_region
        _
      $region16: #{appnp_forward.3} parent=11 // pred_fallthru
        _
      // Predicated region
      $region17: #{appnp_forward.3} parent=11 // pred_check
        %p106 = pneg %p67
      $region18: #{appnp_forward.3} parent=11 // pred_check_branch
        %108 = sbr.rel (%p106) target = $region20
      $region19: #{appnp_forward.3} parent=11 // pred_region
        %s109 = smul.u32 32, %s18
        %p110 = scmp.lt.s32.totalorder %s109, 31
        %s111 = scalar_select %p110, %s109, 31
        %s112 = smul.addr %s111, 2
        %s113 = smul.addr %s112, 8
        %s114 = scalar_lea.vmem %s1, %s113
        %s115 = smul.u32 32, %s18
      $region20: #{appnp_forward.3} parent=11 // pred_fallthru
        _
    $region12: #{appnp_forward.3} parent=5 // pred_fallthru
      _
    %p116 = scmp.lt.s32.totalorder %s8, 10
    // Predicated region
    $region21: #{appnp_forward.3} parent=5 // pred_check
      %p117 = pneg %p116
    $region22: #{appnp_forward.3} parent=5 // pred_check_branch
      %119 = sbr.rel (%p117) target = $region24
    $region23: #{appnp_forward.3} parent=5 // pred_region
      _
    $region24: #{appnp_forward.3} parent=5 // pred_fallthru
      _
    %p120 = scmp.le.s32.totalorder 1, %s8
    %p121 = scmp.lt.s32.totalorder %s8, 11
    %p122 = pnand %p120, %p121
    %p123 = pneg %p122
    // Predicated region
    $region25: #{appnp_forward.3} parent=5 // pred_check
      _
    $region26: #{appnp_forward.3} parent=5 // pred_check_branch
      %125 = sbr.rel (%p122) target = $region28
    $region27: #{appnp_forward.3} parent=5 // pred_region
      %s126 = ssub.s32 %s8, 1
      %p127 = pneg %p41
      %p128 = pneg %p38
      %s129 = smul.u32 32, %s18
      %p130 = scmp.lt.s32.totalorder %s129, 31
      %s131 = scalar_select %p130, %s129, 31
      %s132 = smul.addr %s131, 2
      %s133 = smul.addr %s132, 8
      %s134 = scalar_lea.vmem %s1, %s133
      %p135 = pneg %p67
      %p136 = pneg %p64
      %p137 = pneg %p88
      %p138 = pneg %p85
      %s139 = smul.u32 32, %s18
      %p140 = scmp.lt.s32.totalorder %s139, 31
      %s141 = scalar_select %p140, %s139, 31
      %s142 = smul.addr %s141, 2
      %s143 = smul.addr %s142, 8
      %s144 = scalar_lea.vmem %s1, %s143
      %s145 = smul.u32 32, %s18
      %s146 = smul.u32 %s18, 256
      %p147 = scmp.eq.s32.totalorder %s17, 0
      %p148 = scmp.eq.s32.totalorder %s18, 0
      %p149 = pnand %p147, %p148
      %p150 = pneg %p149
      // Predicated region
      $region29: #{appnp_forward.3} parent=27 // pred_check
        _
      $region30: #{appnp_forward.3} parent=27 // pred_check_branch
        %152 = sbr.rel (%p149) target = $region32
      $region31: #{appnp_forward.3} parent=27 // pred_region
        %v153 = vld [vmem:[%s0] sm:$0xff]
        %v154 = vld [vmem:[%s0 + $0x8] sm:$0xff]
        %v155 = vld [vmem:[%s0 + $0x10] sm:$0xff]
        %v156 = vld [vmem:[%s0 + $0x18] sm:$0xff]
        %v157 = vld [vmem:[%s0 + $0x20] sm:$0xff]
        %v158 = vld [vmem:[%s0 + $0x28] sm:$0xff]
        %v159 = vld [vmem:[%s0 + $0x30] sm:$0xff]
        %v160 = vld [vmem:[%s0 + $0x38] sm:$0xff]
        %v161 = vld [vmem:[%s0 + $0x40] sm:$0xff]
        %v162 = vld [vmem:[%s0 + $0x48] sm:$0xff]
        %v163 = vld [vmem:[%s0 + $0x50] sm:$0xff]
        %v164 = vld [vmem:[%s0 + $0x58] sm:$0xff]
        %v165 = vld [vmem:[%s0 + $0x60] sm:$0xff]
        %v166 = vld [vmem:[%s0 + $0x68] sm:$0xff]
        %v167 = vld [vmem:[%s0 + $0x70] sm:$0xff]
        %v168 = vld [vmem:[%s0 + $0x78] sm:$0xff]
        %v169 = vld [vmem:[%s0 + $0x80] sm:$0xff]
        %v170 = vld [vmem:[%s0 + $0x88] sm:$0xff]
        %v171 = vld [vmem:[%s0 + $0x90] sm:$0xff]
        %v172 = vld [vmem:[%s0 + $0x98] sm:$0xff]
        %v173 = vld [vmem:[%s0 + $0xa0] sm:$0xff]
        %v174 = vld [vmem:[%s0 + $0xa8] sm:$0xff]
        %v175 = vld [vmem:[%s0 + $0xb0] sm:$0xff]
        %v176 = vld [vmem:[%s0 + $0xb8] sm:$0xff]
        %v177 = vld [vmem:[%s0 + $0xc0] sm:$0xff]
        %v178 = vld [vmem:[%s0 + $0xc8] sm:$0xff]
        %v179 = vld [vmem:[%s0 + $0xd0] sm:$0xff]
        %v180 = vld [vmem:[%s0 + $0xd8] sm:$0xff]
        %v181 = vld [vmem:[%s0 + $0xe0] sm:$0xff]
        %v182 = vld [vmem:[%s0 + $0xe8] sm:$0xff]
        %v183 = vld [vmem:[%s0 + $0xf0] sm:$0xff]
        %v184 = vld [vmem:[%s0 + $0xf8] sm:$0xff]
        %185 = vst [vmem:[%s2] sm:$0xff] %v153
        %186 = vst [vmem:[%s2 + $0x8] sm:$0xff] %v154
        %187 = vst [vmem:[%s2 + $0x10] sm:$0xff] %v155
        %188 = vst [vmem:[%s2 + $0x18] sm:$0xff] %v156
        %189 = vst [vmem:[%s2 + $0x20] sm:$0xff] %v157
        %190 = vst [vmem:[%s2 + $0x28] sm:$0xff] %v158
        %191 = vst [vmem:[%s2 + $0x30] sm:$0xff] %v159
        %192 = vst [vmem:[%s2 + $0x38] sm:$0xff] %v160
        %193 = vst [vmem:[%s2 + $0x40] sm:$0xff] %v161
        %194 = vst [vmem:[%s2 + $0x48] sm:$0xff] %v162
        %195 = vst [vmem:[%s2 + $0x50] sm:$0xff] %v163
        %196 = vst [vmem:[%s2 + $0x58] sm:$0xff] %v164
        %197 = vst [vmem:[%s2 + $0x60] sm:$0xff] %v165
        %198 = vst [vmem:[%s2 + $0x68] sm:$0xff] %v166
        %199 = vst [vmem:[%s2 + $0x70] sm:$0xff] %v167
        %200 = vst [vmem:[%s2 + $0x78] sm:$0xff] %v168
        %201 = vst [vmem:[%s2 + $0x80] sm:$0xff] %v169
        %202 = vst [vmem:[%s2 + $0x88] sm:$0xff] %v170
        %203 = vst [vmem:[%s2 + $0x90] sm:$0xff] %v171
        %204 = vst [vmem:[%s2 + $0x98] sm:$0xff] %v172
        %205 = vst [vmem:[%s2 + $0xa0] sm:$0xff] %v173
        %206 = vst [vmem:[%s2 + $0xa8] sm:$0xff] %v174
        %207 = vst [vmem:[%s2 + $0xb0] sm:$0xff] %v175
        %208 = vst [vmem:[%s2 + $0xb8] sm:$0xff] %v176
        %209 = vst [vmem:[%s2 + $0xc0] sm:$0xff] %v177
        %210 = vst [vmem:[%s2 + $0xc8] sm:$0xff] %v178
        %211 = vst [vmem:[%s2 + $0xd0] sm:$0xff] %v179
        %212 = vst [vmem:[%s2 + $0xd8] sm:$0xff] %v180
        %213 = vst [vmem:[%s2 + $0xe0] sm:$0xff] %v181
        %214 = vst [vmem:[%s2 + $0xe8] sm:$0xff] %v182
        %215 = vst [vmem:[%s2 + $0xf0] sm:$0xff] %v183
        %216 = vst [vmem:[%s2 + $0xf8] sm:$0xff] %v184
      $region32: #{appnp_forward.3} parent=27 // pred_fallthru
        _
      %p217 = scmp.lt.s32.totalorder %s17, 0
      %s218 = ssub.s32 0, %s17
      %s219 = scalar_select %p217, %s218, %s17
      %s220 = sand.u32 %s219, 1
      %s221 = ssub.s32 0, %s220
      %s222 = scalar_select %p217, %s221, %s220
      %p223 = scmp.ne.s32.totalorder %s222, 0
      %p224 = scmp.lt.s32.totalorder %s222, 0
      %p225 = pnand %p224, %p223
      %p226 = pneg %p225
      %s227 = sadd.s32 %s222, 2
      %s228 = scalar_select %p226, %s227, %s222
      %p229 = scmp.eq.s32.totalorder %s228, 0
      // Predicated region
      $region33: #{appnp_forward.3} parent=27 // pred_check
        %p230 = pneg %p229
      $region34: #{appnp_forward.3} parent=27 // pred_check_branch
        %232 = sbr.rel (%p230) target = $region36
      $region35: #{appnp_forward.3} parent=27 // pred_region
        %v233 = vld [vmem:[%s144] sm:$0xff]
        %v234 = vld [vmem:[%s144 + $0x8] sm:$0xff]
        %v235 = vld [vmem:[%s144 + $0x10] sm:$0xff]
        %v236 = vld [vmem:[%s144 + $0x18] sm:$0xff]
        %v237 = vld [vmem:[%s144 + $0x20] sm:$0xff]
        %v238 = vld [vmem:[%s144 + $0x28] sm:$0xff]
        %v239 = vld [vmem:[%s144 + $0x30] sm:$0xff]
        %v240 = vld [vmem:[%s144 + $0x38] sm:$0xff]
        %v241 = vld [vmem:[%s144 + $0x40] sm:$0xff]
        %v242 = vld [vmem:[%s144 + $0x48] sm:$0xff]
        %v243 = vld [vmem:[%s144 + $0x50] sm:$0xff]
        %v244 = vld [vmem:[%s144 + $0x58] sm:$0xff]
        %v245 = vld [vmem:[%s144 + $0x60] sm:$0xff]
        %v246 = vld [vmem:[%s144 + $0x68] sm:$0xff]
        %v247 = vld [vmem:[%s144 + $0x70] sm:$0xff]
        %v248 = vld [vmem:[%s144 + $0x78] sm:$0xff]
        %v249 = vld [vmem:[%s144 + $0x80] sm:$0xff]
        %v250 = vld [vmem:[%s144 + $0x88] sm:$0xff]
        %v251 = vld [vmem:[%s144 + $0x90] sm:$0xff]
        %v252 = vld [vmem:[%s144 + $0x98] sm:$0xff]
        %v253 = vld [vmem:[%s144 + $0xa0] sm:$0xff]
        %v254 = vld [vmem:[%s144 + $0xa8] sm:$0xff]
        %v255 = vld [vmem:[%s144 + $0xb0] sm:$0xff]
        %v256 = vld [vmem:[%s144 + $0xb8] sm:$0xff]
        %v257 = vld [vmem:[%s144 + $0xc0] sm:$0xff]
        %v258 = vld [vmem:[%s144 + $0xc8] sm:$0xff]
        %v259 = vld [vmem:[%s144 + $0xd0] sm:$0xff]
        %v260 = vld [vmem:[%s144 + $0xd8] sm:$0xff]
        %v261 = vld [vmem:[%s144 + $0xe0] sm:$0xff]
        %v262 = vld [vmem:[%s144 + $0xe8] sm:$0xff]
        %v263 = vld [vmem:[%s144 + $0xf0] sm:$0xff]
        %v264 = vld [vmem:[%s144 + $0xf8] sm:$0xff]
        %v265 = vld [vmem:[%s144 + $0x100] sm:$0xff]
        %v266 = vld [vmem:[%s144 + $0x108] sm:$0xff]
        %v267 = vld [vmem:[%s144 + $0x110] sm:$0xff]
        %v268 = vld [vmem:[%s144 + $0x118] sm:$0xff]
        %v269 = vld [vmem:[%s144 + $0x120] sm:$0xff]
        %v270 = vld [vmem:[%s144 + $0x128] sm:$0xff]
        %v271 = vld [vmem:[%s144 + $0x130] sm:$0xff]
        %v272 = vld [vmem:[%s144 + $0x138] sm:$0xff]
        %v273 = vld [vmem:[%s144 + $0x140] sm:$0xff]
        %v274 = vld [vmem:[%s144 + $0x148] sm:$0xff]
        %v275 = vld [vmem:[%s144 + $0x150] sm:$0xff]
        %v276 = vld [vmem:[%s144 + $0x158] sm:$0xff]
        %v277 = vld [vmem:[%s144 + $0x160] sm:$0xff]
        %v278 = vld [vmem:[%s144 + $0x168] sm:$0xff]
        %v279 = vld [vmem:[%s144 + $0x170] sm:$0xff]
        %v280 = vld [vmem:[%s144 + $0x178] sm:$0xff]
        %v281 = vld [vmem:[%s144 + $0x180] sm:$0xff]
        %v282 = vld [vmem:[%s144 + $0x188] sm:$0xff]
        %v283 = vld [vmem:[%s144 + $0x190] sm:$0xff]
        %v284 = vld [vmem:[%s144 + $0x198] sm:$0xff]
        %v285 = vld [vmem:[%s144 + $0x1a0] sm:$0xff]
        %v286 = vld [vmem:[%s144 + $0x1a8] sm:$0xff]
        %v287 = vld [vmem:[%s144 + $0x1b0] sm:$0xff]
        %v288 = vld [vmem:[%s144 + $0x1b8] sm:$0xff]
        %v289 = vld [vmem:[%s144 + $0x1c0] sm:$0xff]
        %v290 = vld [vmem:[%s144 + $0x1c8] sm:$0xff]
        %v291 = vld [vmem:[%s144 + $0x1d0] sm:$0xff]
        %v292 = vld [vmem:[%s144 + $0x1d8] sm:$0xff]
        %v293 = vld [vmem:[%s144 + $0x1e0] sm:$0xff]
        %v294 = vld [vmem:[%s144 + $0x1e8] sm:$0xff]
        %v295 = vld [vmem:[%s144 + $0x1f0] sm:$0xff]
        %v296 = vld [vmem:[%s144 + $0x1f8] sm:$0xff]
        %v297 = vld [vmem:[%s2] sm:$0xff]
        %v298 = vld [vmem:[%s2 + $0x8] sm:$0xff]
        %v299 = vld [vmem:[%s2 + $0x10] sm:$0xff]
        %v300 = vld [vmem:[%s2 + $0x18] sm:$0xff]
        %v301 = vld [vmem:[%s2 + $0x20] sm:$0xff]
        %v302 = vld [vmem:[%s2 + $0x28] sm:$0xff]
        %v303 = vld [vmem:[%s2 + $0x30] sm:$0xff]
        %v304 = vld [vmem:[%s2 + $0x38] sm:$0xff]
        %v305 = vld [vmem:[%s2 + $0x40] sm:$0xff]
        %v306 = vld [vmem:[%s2 + $0x48] sm:$0xff]
        %v307 = vld [vmem:[%s2 + $0x50] sm:$0xff]
        %v308 = vld [vmem:[%s2 + $0x58] sm:$0xff]
        %v309 = vld [vmem:[%s2 + $0x60] sm:$0xff]
        %v310 = vld [vmem:[%s2 + $0x68] sm:$0xff]
        %v311 = vld [vmem:[%s2 + $0x70] sm:$0xff]
        %v312 = vld [vmem:[%s2 + $0x78] sm:$0xff]
        %v313 = vld [vmem:[%s2 + $0x80] sm:$0xff]
        %v314 = vld [vmem:[%s2 + $0x88] sm:$0xff]
        %v315 = vld [vmem:[%s2 + $0x90] sm:$0xff]
        %v316 = vld [vmem:[%s2 + $0x98] sm:$0xff]
        %v317 = vld [vmem:[%s2 + $0xa0] sm:$0xff]
        %v318 = vld [vmem:[%s2 + $0xa8] sm:$0xff]
        %v319 = vld [vmem:[%s2 + $0xb0] sm:$0xff]
        %v320 = vld [vmem:[%s2 + $0xb8] sm:$0xff]
        %v321 = vld [vmem:[%s2 + $0xc0] sm:$0xff]
        %v322 = vld [vmem:[%s2 + $0xc8] sm:$0xff]
        %v323 = vld [vmem:[%s2 + $0xd0] sm:$0xff]
        %v324 = vld [vmem:[%s2 + $0xd8] sm:$0xff]
        %v325 = vld [vmem:[%s2 + $0xe0] sm:$0xff]
        %v326 = vld [vmem:[%s2 + $0xe8] sm:$0xff]
        %v327 = vld [vmem:[%s2 + $0xf0] sm:$0xff]
        %v328 = vld [vmem:[%s2 + $0xf8] sm:$0xff]
        %329 = vmatprep.subr.mxu0 0.0
        %330 = vmatpush1.msra.mxu0 %v297
        %331 = vmatprep.subr.mxu0 0.0
        %332 = vmatpush1.msra.mxu0 %v298
        %333 = vmatprep.subr.mxu0 0.0
        %334 = vmatpush1.msra.mxu0 %v299
        %335 = vmatprep.subr.mxu0 0.0
        %336 = vmatpush1.msra.mxu0 %v300
        %337 = vmatprep.subr.mxu0 0.0
        %338 = vmatpush1.msra.mxu0 %v301
        %339 = vmatprep.subr.mxu0 0.0
        %340 = vmatpush1.msra.mxu0 %v302
        %341 = vmatprep.subr.mxu0 0.0
        %342 = vmatpush1.msra.mxu0 %v303
        %343 = vmatprep.subr.mxu0 0.0
        %344 = vmatpush1.msra.mxu0 %v304
        %345 = vmatprep.subr.mxu0 0.0
        %346 = vmatpush1.msra.mxu0 %v305
        %347 = vmatprep.subr.mxu0 0.0
        %348 = vmatpush1.msra.mxu0 %v306
        %349 = vmatprep.subr.mxu0 0.0
        %350 = vmatpush1.msra.mxu0 %v307
        %351 = vmatprep.subr.mxu0 0.0
        %352 = vmatpush1.msra.mxu0 %v308
        %353 = vmatprep.subr.mxu0 0.0
        %354 = vmatpush1.msra.mxu0 %v309
        %355 = vmatprep.subr.mxu0 0.0
        %356 = vmatpush1.msra.mxu0 %v310
        %357 = vmatprep.subr.mxu0 0.0
        %358 = vmatpush1.msra.mxu0 %v311
        %359 = vmatprep.subr.mxu0 0.0
        %360 = vmatpush1.msra.mxu0 %v312
        %361 = vmatprep.subr.mxu0 0.0
        %362 = vmatpush1.msra.mxu0 %v313
        %363 = vmatprep.subr.mxu0 0.0
        %364 = vmatpush1.msra.mxu0 %v314
        %365 = vmatprep.subr.mxu0 0.0
        %366 = vmatpush1.msra.mxu0 %v315
        %367 = vmatprep.subr.mxu0 0.0
        %368 = vmatpush1.msra.mxu0 %v316
        %369 = vmatprep.subr.mxu0 0.0
        %370 = vmatpush1.msra.mxu0 %v317
        %371 = vmatprep.subr.mxu0 0.0
        %372 = vmatpush1.msra.mxu0 %v318
        %373 = vmatprep.subr.mxu0 0.0
        %374 = vmatpush1.msra.mxu0 %v319
        %375 = vmatprep.subr.mxu0 0.0
        %376 = vmatpush1.msra.mxu0 %v320
        %377 = vmatprep.subr.mxu0 0.0
        %378 = vmatpush1.msra.mxu0 %v321
        %379 = vmatprep.subr.mxu0 0.0
        %380 = vmatpush1.msra.mxu0 %v322
        %381 = vmatprep.subr.mxu0 0.0
        %382 = vmatpush1.msra.mxu0 %v323
        %383 = vmatprep.subr.mxu0 0.0
        %384 = vmatpush1.msra.mxu0 %v324
        %385 = vmatprep.subr.mxu0 0.0
        %386 = vmatpush1.msra.mxu0 %v325
        %387 = vmatprep.subr.mxu0 0.0
        %388 = vmatpush1.msra.mxu0 %v326
        %389 = vmatprep.subr.mxu0 0.0
        %390 = vmatpush1.msra.mxu0 %v327
        %391 = vmatprep.subr.mxu0 0.0
        %392 = vmatpush1.msra.mxu0 %v328
        %393 = vmatprep.mubr.f32.mxu0 %v234
        %394 = vmatmul.mubr.f32.gmra.mrb[0].mxu0 %v233
        %v395 = vpop.f32.mrb[0].mxu0
        %v396 = vadd.f32 0.0, %v395
        %v397 = vpop.f32.mrb[0].mxu0
        %398 = vmatprep.mubr.f32.mxu0 %v236
        %399 = vmatmul.mubr.f32.gmra.mrb[0].mxu0 %v235
        %v400 = vpop.f32.mrb[0].mxu0
        %v401 = vadd.f32 0.0, %v400
        %v402 = vpop.f32.mrb[0].mxu0
        %403 = vmatprep.mubr.f32.mxu0 %v238
        %404 = vmatmul.mubr.f32.gmra.mrb[0].mxu0 %v237
        %v405 = vpop.f32.mrb[0].mxu0
        %v406 = vadd.f32 0.0, %v405
        %v407 = vpop.f32.mrb[0].mxu0
        %408 = vmatprep.mubr.f32.mxu0 %v240
        %409 = vmatmul.mubr.f32.gmra.mrb[0].mxu0 %v239
        %v410 = vpop.f32.mrb[0].mxu0
        %v411 = vadd.f32 0.0, %v410
        %v412 = vpop.f32.mrb[0].mxu0
        %413 = vmatprep.mubr.f32.mxu0 %v242
        %414 = vmatmul.mubr.f32.gmra.mrb[0].mxu0 %v241
        %v415 = vpop.f32.mrb[0].mxu0
        %v416 = vadd.f32 0.0, %v415
        %v417 = vpop.f32.mrb[0].mxu0
        %418 = vmatprep.mubr.f32.mxu0 %v244
        %419 = vmatmul.mubr.f32.gmra.mrb[0].mxu0 %v243
        %v420 = vpop.f32.mrb[0].mxu0
        %v421 = vadd.f32 0.0, %v420
        %v422 = vpop.f32.mrb[0].mxu0
        %423 = vmatprep.mubr.f32.mxu0 %v246
        %424 = vmatmul.mubr.f32.gmra.mrb[0].mxu0 %v245
        %v425 = vpop.f32.mrb[0].mxu0
        %v426 = vadd.f32 0.0, %v425
        %v427 = vpop.f32.mrb[0].mxu0
        %428 = vmatprep.mubr.f32.mxu0 %v248
        %429 = vmatmul.mubr.f32.gmra.mrb[0].mxu0 %v247
        %v430 = vpop.f32.mrb[0].mxu0
        %v431 = vadd.f32 0.0, %v430
        %v432 = vpop.f32.mrb[0].mxu0
        %433 = vmatprep.mubr.f32.mxu0 %v250
        %434 = vmatmul.mubr.f32.gmra.mrb[0].mxu0 %v249
        %v435 = vpop.f32.mrb[0].mxu0
        %v436 = vadd.f32 0.0, %v435
        %v437 = vpop.f32.mrb[0].mxu0
        %438 = vmatprep.mubr.f32.mxu0 %v252
        %439 = vmatmul.mubr.f32.gmra.mrb[0].mxu0 %v251
        %v440 = vpop.f32.mrb[0].mxu0
        %v441 = vadd.f32 0.0, %v440
        %v442 = vpop.f32.mrb[0].mxu0
        %443 = vmatprep.mubr.f32.mxu0 %v254
        %444 = vmatmul.mubr.f32.gmra.mrb[0].mxu0 %v253
        %v445 = vpop.f32.mrb[0].mxu0
        %v446 = vadd.f32 0.0, %v445
        %v447 = vpop.f32.mrb[0].mxu0
        %448 = vmatprep.mubr.f32.mxu0 %v256
        %449 = vmatmul.mubr.f32.gmra.mrb[0].mxu0 %v255
        %v450 = vpop.f32.mrb[0].mxu0
        %v451 = vadd.f32 0.0, %v450
        %v452 = vpop.f32.mrb[0].mxu0
        %453 = vmatprep.mubr.f32.mxu0 %v258
        %454 = vmatmul.mubr.f32.gmra.mrb[0].mxu0 %v257
        %v455 = vpop.f32.mrb[0].mxu0
        %v456 = vadd.f32 0.0, %v455
        %v457 = vpop.f32.mrb[0].mxu0
        %458 = vmatprep.mubr.f32.mxu0 %v260
        %459 = vmatmul.mubr.f32.gmra.mrb[0].mxu0 %v259
        %v460 = vpop.f32.mrb[0].mxu0
        %v461 = vadd.f32 0.0, %v460
        %v462 = vpop.f32.mrb[0].mxu0
        %463 = vmatprep.mubr.f32.mxu0 %v262
        %464 = vmatmul.mubr.f32.gmra.mrb[0].mxu0 %v261
        %v465 = vpop.f32.mrb[0].mxu0
        %v466 = vadd.f32 0.0, %v465
        %v467 = vpop.f32.mrb[0].mxu0
        %468 = vmatprep.mubr.f32.mxu0 %v264
        %469 = vmatmul.mubr.f32.gmra.mrb[0].mxu0 %v263
        %v470 = vpop.f32.mrb[0].mxu0
        %v471 = vadd.f32 0.0, %v470
        %v472 = vpop.f32.mrb[0].mxu0
        %473 = vmatprep.mubr.f32.mxu0 %v266
        %474 = vmatmul.mubr.f32.gmra.mrb[0].mxu0 %v265
        %v475 = vpop.f32.mrb[0].mxu0
        %v476 = vadd.f32 0.0, %v475
        %v477 = vpop.f32.mrb[0].mxu0
        %478 = vmatprep.mubr.f32.mxu0 %v268
        %479 = vmatmul.mubr.f32.gmra.mrb[0].mxu0 %v267
        %v480 = vpop.f32.mrb[0].mxu0
        %v481 = vadd.f32 0.0, %v480
        %v482 = vpop.f32.mrb[0].mxu0
        %483 = vmatprep.mubr.f32.mxu0 %v270
        %484 = vmatmul.mubr.f32.gmra.mrb[0].mxu0 %v269
        %v485 = vpop.f32.mrb[0].mxu0
        %v486 = vadd.f32 0.0, %v485
        %v487 = vpop.f32.mrb[0].mxu0
        %488 = vmatprep.mubr.f32.mxu0 %v272
        %489 = vmatmul.mubr.f32.gmra.mrb[0].mxu0 %v271
        %v490 = vpop.f32.mrb[0].mxu0
        %v491 = vadd.f32 0.0, %v490
        %v492 = vpop.f32.mrb[0].mxu0
        %493 = vmatprep.mubr.f32.mxu0 %v274
        %494 = vmatmul.mubr.f32.gmra.mrb[0].mxu0 %v273
        %v495 = vpop.f32.mrb[0].mxu0
        %v496 = vadd.f32 0.0, %v495
        %v497 = vpop.f32.mrb[0].mxu0
        %498 = vmatprep.mubr.f32.mxu0 %v276
        %499 = vmatmul.mubr.f32.gmra.mrb[0].mxu0 %v275
        %v500 = vpop.f32.mrb[0].mxu0
        %v501 = vadd.f32 0.0, %v500
        %v502 = vpop.f32.mrb[0].mxu0
        %503 = vmatprep.mubr.f32.mxu0 %v278
        %504 = vmatmul.mubr.f32.gmra.mrb[0].mxu0 %v277
        %v505 = vpop.f32.mrb[0].mxu0
        %v506 = vadd.f32 0.0, %v505
        %v507 = vpop.f32.mrb[0].mxu0
        %508 = vmatprep.mubr.f32.mxu0 %v280
        %509 = vmatmul.mubr.f32.gmra.mrb[0].mxu0 %v279
        %v510 = vpop.f32.mrb[0].mxu0
        %v511 = vadd.f32 0.0, %v510
        %v512 = vpop.f32.mrb[0].mxu0
        %513 = vmatprep.mubr.f32.mxu0 %v282
        %514 = vmatmul.mubr.f32.gmra.mrb[0].mxu0 %v281
        %v515 = vpop.f32.mrb[0].mxu0
        %v516 = vadd.f32 0.0, %v515
        %v517 = vpop.f32.mrb[0].mxu0
        %518 = vmatprep.mubr.f32.mxu0 %v284
        %519 = vmatmul.mubr.f32.gmra.mrb[0].mxu0 %v283
        %v520 = vpop.f32.mrb[0].mxu0
        %v521 = vadd.f32 0.0, %v520
        %v522 = vpop.f32.mrb[0].mxu0
        %523 = vmatprep.mubr.f32.mxu0 %v286
        %524 = vmatmul.mubr.f32.gmra.mrb[0].mxu0 %v285
        %v525 = vpop.f32.mrb[0].mxu0
        %v526 = vadd.f32 0.0, %v525
        %v527 = vpop.f32.mrb[0].mxu0
        %528 = vmatprep.mubr.f32.mxu0 %v288
        %529 = vmatmul.mubr.f32.gmra.mrb[0].mxu0 %v287
        %v530 = vpop.f32.mrb[0].mxu0
        %v531 = vadd.f32 0.0, %v530
        %v532 = vpop.f32.mrb[0].mxu0
        %533 = vmatprep.mubr.f32.mxu0 %v290
        %534 = vmatmul.mubr.f32.gmra.mrb[0].mxu0 %v289
        %v535 = vpop.f32.mrb[0].mxu0
        %v536 = vadd.f32 0.0, %v535
        %v537 = vpop.f32.mrb[0].mxu0
        %538 = vmatprep.mubr.f32.mxu0 %v292
        %539 = vmatmul.mubr.f32.gmra.mrb[0].mxu0 %v291
        %v540 = vpop.f32.mrb[0].mxu0
        %v541 = vadd.f32 0.0, %v540
        %v542 = vpop.f32.mrb[0].mxu0
        %543 = vmatprep.mubr.f32.mxu0 %v294
        %544 = vmatmul.mubr.f32.gmra.mrb[0].mxu0 %v293
        %v545 = vpop.f32.mrb[0].mxu0
        %v546 = vadd.f32 0.0, %v545
        %v547 = vpop.f32.mrb[0].mxu0
        %548 = vmatprep.mubr.f32.mxu0 %v296
        %549 = vmatmul.mubr.f32.gmra.mrb[0].mxu0 %v295
        %v550 = vpop.f32.mrb[0].mxu0
        %v551 = vadd.f32 0.0, %v550
        %v552 = vpop.f32.mrb[0].mxu0
        %553 = vdwg.mxu0
        %v554 = vmul.f32 %v396, 0.9
        %v555 = vmul.f32 %v401, 0.9
        %v556 = vmul.f32 %v406, 0.9
        %v557 = vmul.f32 %v411, 0.9
        %v558 = vmul.f32 %v416, 0.9
        %v559 = vmul.f32 %v421, 0.9
        %v560 = vmul.f32 %v426, 0.9
        %v561 = vmul.f32 %v431, 0.9
        %v562 = vmul.f32 %v436, 0.9
        %v563 = vmul.f32 %v441, 0.9
        %v564 = vmul.f32 %v446, 0.9
        %v565 = vmul.f32 %v451, 0.9
        %v566 = vmul.f32 %v456, 0.9
        %v567 = vmul.f32 %v461, 0.9
        %v568 = vmul.f32 %v466, 0.9
        %v569 = vmul.f32 %v471, 0.9
        %v570 = vmul.f32 %v476, 0.9
        %v571 = vmul.f32 %v481, 0.9
        %v572 = vmul.f32 %v486, 0.9
        %v573 = vmul.f32 %v491, 0.9
        %v574 = vmul.f32 %v496, 0.9
        %v575 = vmul.f32 %v501, 0.9
        %v576 = vmul.f32 %v506, 0.9
        %v577 = vmul.f32 %v511, 0.9
        %v578 = vmul.f32 %v516, 0.9
        %v579 = vmul.f32 %v521, 0.9
        %v580 = vmul.f32 %v526, 0.9
        %v581 = vmul.f32 %v531, 0.9
        %v582 = vmul.f32 %v536, 0.9
        %v583 = vmul.f32 %v541, 0.9
        %v584 = vmul.f32 %v546, 0.9
        %v585 = vmul.f32 %v551, 0.9
        %s586 = scalar_lea.vmem %s0, %s146
        %v587 = vld [vmem:[%s586] sm:$0xff]
        %v588 = vld [vmem:[%s586 + $0x8] sm:$0xff]
        %v589 = vld [vmem:[%s586 + $0x10] sm:$0xff]
        %v590 = vld [vmem:[%s586 + $0x18] sm:$0xff]
        %v591 = vld [vmem:[%s586 + $0x20] sm:$0xff]
        %v592 = vld [vmem:[%s586 + $0x28] sm:$0xff]
        %v593 = vld [vmem:[%s586 + $0x30] sm:$0xff]
        %v594 = vld [vmem:[%s586 + $0x38] sm:$0xff]
        %v595 = vld [vmem:[%s586 + $0x40] sm:$0xff]
        %v596 = vld [vmem:[%s586 + $0x48] sm:$0xff]
        %v597 = vld [vmem:[%s586 + $0x50] sm:$0xff]
        %v598 = vld [vmem:[%s586 + $0x58] sm:$0xff]
        %v599 = vld [vmem:[%s586 + $0x60] sm:$0xff]
        %v600 = vld [vmem:[%s586 + $0x68] sm:$0xff]
        %v601 = vld [vmem:[%s586 + $0x70] sm:$0xff]
        %v602 = vld [vmem:[%s586 + $0x78] sm:$0xff]
        %v603 = vld [vmem:[%s586 + $0x80] sm:$0xff]
        %v604 = vld [vmem:[%s586 + $0x88] sm:$0xff]
        %v605 = vld [vmem:[%s586 + $0x90] sm:$0xff]
        %v606 = vld [vmem:[%s586 + $0x98] sm:$0xff]
        %v607 = vld [vmem:[%s586 + $0xa0] sm:$0xff]
        %v608 = vld [vmem:[%s586 + $0xa8] sm:$0xff]
        %v609 = vld [vmem:[%s586 + $0xb0] sm:$0xff]
        %v610 = vld [vmem:[%s586 + $0xb8] sm:$0xff]
        %v611 = vld [vmem:[%s586 + $0xc0] sm:$0xff]
        %v612 = vld [vmem:[%s586 + $0xc8] sm:$0xff]
        %v613 = vld [vmem:[%s586 + $0xd0] sm:$0xff]
        %v614 = vld [vmem:[%s586 + $0xd8] sm:$0xff]
        %v615 = vld [vmem:[%s586 + $0xe0] sm:$0xff]
        %v616 = vld [vmem:[%s586 + $0xe8] sm:$0xff]
        %v617 = vld [vmem:[%s586 + $0xf0] sm:$0xff]
        %v618 = vld [vmem:[%s586 + $0xf8] sm:$0xff]
        %v619 = vmul.f32 %v587, 0.1
        %v620 = vmul.f32 %v588, 0.1
        %v621 = vmul.f32 %v589, 0.1
        %v622 = vmul.f32 %v590, 0.1
        %v623 = vmul.f32 %v591, 0.1
        %v624 = vmul.f32 %v592, 0.1
        %v625 = vmul.f32 %v593, 0.1
        %v626 = vmul.f32 %v594, 0.1
        %v627 = vmul.f32 %v595, 0.1
        %v628 = vmul.f32 %v596, 0.1
        %v629 = vmul.f32 %v597, 0.1
        %v630 = vmul.f32 %v598, 0.1
        %v631 = vmul.f32 %v599, 0.1
        %v632 = vmul.f32 %v600, 0.1
        %v633 = vmul.f32 %v601, 0.1
        %v634 = vmul.f32 %v602, 0.1
        %v635 = vmul.f32 %v603, 0.1
        %v636 = vmul.f32 %v604, 0.1
        %v637 = vmul.f32 %v605, 0.1
        %v638 = vmul.f32 %v606, 0.1
        %v639 = vmul.f32 %v607, 0.1
        %v640 = vmul.f32 %v608, 0.1
        %v641 = vmul.f32 %v609, 0.1
        %v642 = vmul.f32 %v610, 0.1
        %v643 = vmul.f32 %v611, 0.1
        %v644 = vmul.f32 %v612, 0.1
        %v645 = vmul.f32 %v613, 0.1
        %v646 = vmul.f32 %v614, 0.1
        %v647 = vmul.f32 %v615, 0.1
        %v648 = vmul.f32 %v616, 0.1
        %v649 = vmul.f32 %v617, 0.1
        %v650 = vmul.f32 %v618, 0.1
        %v651 = vadd.f32 %v554, %v619
        %v652 = vadd.f32 %v555, %v620
        %v653 = vadd.f32 %v556, %v621
        %v654 = vadd.f32 %v557, %v622
        %v655 = vadd.f32 %v558, %v623
        %v656 = vadd.f32 %v559, %v624
        %v657 = vadd.f32 %v560, %v625
        %v658 = vadd.f32 %v561, %v626
        %v659 = vadd.f32 %v562, %v627
        %v660 = vadd.f32 %v563, %v628
        %v661 = vadd.f32 %v564, %v629
        %v662 = vadd.f32 %v565, %v630
        %v663 = vadd.f32 %v566, %v631
        %v664 = vadd.f32 %v567, %v632
        %v665 = vadd.f32 %v568, %v633
        %v666 = vadd.f32 %v569, %v634
        %v667 = vadd.f32 %v570, %v635
        %v668 = vadd.f32 %v571, %v636
        %v669 = vadd.f32 %v572, %v637
        %v670 = vadd.f32 %v573, %v638
        %v671 = vadd.f32 %v574, %v639
        %v672 = vadd.f32 %v575, %v640
        %v673 = vadd.f32 %v576, %v641
        %v674 = vadd.f32 %v577, %v642
        %v675 = vadd.f32 %v578, %v643
        %v676 = vadd.f32 %v579, %v644
        %v677 = vadd.f32 %v580, %v645
        %v678 = vadd.f32 %v581, %v646
        %v679 = vadd.f32 %v582, %v647
        %v680 = vadd.f32 %v583, %v648
        %v681 = vadd.f32 %v584, %v649
        %v682 = vadd.f32 %v585, %v650
        %s683 = scalar_lea.vmem [#allocation2], %s146
        %684 = vst [vmem:[%s683] sm:$0xff] %v651
        %685 = vst [vmem:[%s683 + $0x8] sm:$0xff] %v652
        %686 = vst [vmem:[%s683 + $0x10] sm:$0xff] %v653
        %687 = vst [vmem:[%s683 + $0x18] sm:$0xff] %v654
        %688 = vst [vmem:[%s683 + $0x20] sm:$0xff] %v655
        %689 = vst [vmem:[%s683 + $0x28] sm:$0xff] %v656
        %690 = vst [vmem:[%s683 + $0x30] sm:$0xff] %v657
        %691 = vst [vmem:[%s683 + $0x38] sm:$0xff] %v658
        %692 = vst [vmem:[%s683 + $0x40] sm:$0xff] %v659
        %693 = vst [vmem:[%s683 + $0x48] sm:$0xff] %v660
        %694 = vst [vmem:[%s683 + $0x50] sm:$0xff] %v661
        %695 = vst [vmem:[%s683 + $0x58] sm:$0xff] %v662
        %696 = vst [vmem:[%s683 + $0x60] sm:$0xff] %v663
        %697 = vst [vmem:[%s683 + $0x68] sm:$0xff] %v664
        %698 = vst [vmem:[%s683 + $0x70] sm:$0xff] %v665
        %699 = vst [vmem:[%s683 + $0x78] sm:$0xff] %v666
        %700 = vst [vmem:[%s683 + $0x80] sm:$0xff] %v667
        %701 = vst [vmem:[%s683 + $0x88] sm:$0xff] %v668
        %702 = vst [vmem:[%s683 + $0x90] sm:$0xff] %v669
        %703 = vst [vmem:[%s683 + $0x98] sm:$0xff] %v670
        %704 = vst [vmem:[%s683 + $0xa0] sm:$0xff] %v671
        %705 = vst [vmem:[%s683 + $0xa8] sm:$0xff] %v672
        %706 = vst [vmem:[%s683 + $0xb0] sm:$0xff] %v673
        %707 = vst [vmem:[%s683 + $0xb8] sm:$0xff] %v674
        %708 = vst [vmem:[%s683 + $0xc0] sm:$0xff] %v675
        %709 = vst [vmem:[%s683 + $0xc8] sm:$0xff] %v676
        %710 = vst [vmem:[%s683 + $0xd0] sm:$0xff] %v677
        %711 = vst [vmem:[%s683 + $0xd8] sm:$0xff] %v678
        %712 = vst [vmem:[%s683 + $0xe0] sm:$0xff] %v679
        %713 = vst [vmem:[%s683 + $0xe8] sm:$0xff] %v680
        %714 = vst [vmem:[%s683 + $0xf0] sm:$0xff] %v681
        %715 = vst [vmem:[%s683 + $0xf8] sm:$0xff] %v682
      $region36: #{appnp_forward.3} parent=27 // pred_fallthru
        _
      %p716 = scmp.ne.s32.totalorder %s228, 0
      // Predicated region
      $region37: #{appnp_forward.3} parent=27 // pred_check
        %p717 = pneg %p716
      $region38: #{appnp_forward.3} parent=27 // pred_check_branch
        %719 = sbr.rel (%p717) target = $region40
      $region39: #{appnp_forward.3} parent=27 // pred_region
        %v720 = vld [vmem:[%s144] sm:$0xff]
        %v721 = vld [vmem:[%s144 + $0x8] sm:$0xff]
        %v722 = vld [vmem:[%s144 + $0x10] sm:$0xff]
        %v723 = vld [vmem:[%s144 + $0x18] sm:$0xff]
        %v724 = vld [vmem:[%s144 + $0x20] sm:$0xff]
        %v725 = vld [vmem:[%s144 + $0x28] sm:$0xff]
        %v726 = vld [vmem:[%s144 + $0x30] sm:$0xff]
        %v727 = vld [vmem:[%s144 + $0x38] sm:$0xff]
        %v728 = vld [vmem:[%s144 + $0x40] sm:$0xff]
        %v729 = vld [vmem:[%s144 + $0x48] sm:$0xff]
        %v730 = vld [vmem:[%s144 + $0x50] sm:$0xff]
        %v731 = vld [vmem:[%s144 + $0x58] sm:$0xff]
        %v732 = vld [vmem:[%s144 + $0x60] sm:$0xff]
        %v733 = vld [vmem:[%s144 + $0x68] sm:$0xff]
        %v734 = vld [vmem:[%s144 + $0x70] sm:$0xff]
        %v735 = vld [vmem:[%s144 + $0x78] sm:$0xff]
        %v736 = vld [vmem:[%s144 + $0x80] sm:$0xff]
        %v737 = vld [vmem:[%s144 + $0x88] sm:$0xff]
        %v738 = vld [vmem:[%s144 + $0x90] sm:$0xff]
        %v739 = vld [vmem:[%s144 + $0x98] sm:$0xff]
        %v740 = vld [vmem:[%s144 + $0xa0] sm:$0xff]
        %v741 = vld [vmem:[%s144 + $0xa8] sm:$0xff]
        %v742 = vld [vmem:[%s144 + $0xb0] sm:$0xff]
        %v743 = vld [vmem:[%s144 + $0xb8] sm:$0xff]
        %v744 = vld [vmem:[%s144 + $0xc0] sm:$0xff]
        %v745 = vld [vmem:[%s144 + $0xc8] sm:$0xff]
        %v746 = vld [vmem:[%s144 + $0xd0] sm:$0xff]
        %v747 = vld [vmem:[%s144 + $0xd8] sm:$0xff]
        %v748 = vld [vmem:[%s144 + $0xe0] sm:$0xff]
        %v749 = vld [vmem:[%s144 + $0xe8] sm:$0xff]
        %v750 = vld [vmem:[%s144 + $0xf0] sm:$0xff]
        %v751 = vld [vmem:[%s144 + $0xf8] sm:$0xff]
        %v752 = vld [vmem:[%s144 + $0x100] sm:$0xff]
        %v753 = vld [vmem:[%s144 + $0x108] sm:$0xff]
        %v754 = vld [vmem:[%s144 + $0x110] sm:$0xff]
        %v755 = vld [vmem:[%s144 + $0x118] sm:$0xff]
        %v756 = vld [vmem:[%s144 + $0x120] sm:$0xff]
        %v757 = vld [vmem:[%s144 + $0x128] sm:$0xff]
        %v758 = vld [vmem:[%s144 + $0x130] sm:$0xff]
        %v759 = vld [vmem:[%s144 + $0x138] sm:$0xff]
        %v760 = vld [vmem:[%s144 + $0x140] sm:$0xff]
        %v761 = vld [vmem:[%s144 + $0x148] sm:$0xff]
        %v762 = vld [vmem:[%s144 + $0x150] sm:$0xff]
        %v763 = vld [vmem:[%s144 + $0x158] sm:$0xff]
        %v764 = vld [vmem:[%s144 + $0x160] sm:$0xff]
        %v765 = vld [vmem:[%s144 + $0x168] sm:$0xff]
        %v766 = vld [vmem:[%s144 + $0x170] sm:$0xff]
        %v767 = vld [vmem:[%s144 + $0x178] sm:$0xff]
        %v768 = vld [vmem:[%s144 + $0x180] sm:$0xff]
        %v769 = vld [vmem:[%s144 + $0x188] sm:$0xff]
        %v770 = vld [vmem:[%s144 + $0x190] sm:$0xff]
        %v771 = vld [vmem:[%s144 + $0x198] sm:$0xff]
        %v772 = vld [vmem:[%s144 + $0x1a0] sm:$0xff]
        %v773 = vld [vmem:[%s144 + $0x1a8] sm:$0xff]
        %v774 = vld [vmem:[%s144 + $0x1b0] sm:$0xff]
        %v775 = vld [vmem:[%s144 + $0x1b8] sm:$0xff]
        %v776 = vld [vmem:[%s144 + $0x1c0] sm:$0xff]
        %v777 = vld [vmem:[%s144 + $0x1c8] sm:$0xff]
        %v778 = vld [vmem:[%s144 + $0x1d0] sm:$0xff]
        %v779 = vld [vmem:[%s144 + $0x1d8] sm:$0xff]
        %v780 = vld [vmem:[%s144 + $0x1e0] sm:$0xff]
        %v781 = vld [vmem:[%s144 + $0x1e8] sm:$0xff]
        %v782 = vld [vmem:[%s144 + $0x1f0] sm:$0xff]
        %v783 = vld [vmem:[%s144 + $0x1f8] sm:$0xff]
        %v784 = vld [vmem:[#allocation2] sm:$0xff]
        %v785 = vld [vmem:[#allocation2 + $0x8] sm:$0xff]
        %v786 = vld [vmem:[#allocation2 + $0x10] sm:$0xff]
        %v787 = vld [vmem:[#allocation2 + $0x18] sm:$0xff]
        %v788 = vld [vmem:[#allocation2 + $0x20] sm:$0xff]
        %v789 = vld [vmem:[#allocation2 + $0x28] sm:$0xff]
        %v790 = vld [vmem:[#allocation2 + $0x30] sm:$0xff]
        %v791 = vld [vmem:[#allocation2 + $0x38] sm:$0xff]
        %v792 = vld [vmem:[#allocation2 + $0x40] sm:$0xff]
        %v793 = vld [vmem:[#allocation2 + $0x48] sm:$0xff]
        %v794 = vld [vmem:[#allocation2 + $0x50] sm:$0xff]
        %v795 = vld [vmem:[#allocation2 + $0x58] sm:$0xff]
        %v796 = vld [vmem:[#allocation2 + $0x60] sm:$0xff]
        %v797 = vld [vmem:[#allocation2 + $0x68] sm:$0xff]
        %v798 = vld [vmem:[#allocation2 + $0x70] sm:$0xff]
        %v799 = vld [vmem:[#allocation2 + $0x78] sm:$0xff]
        %v800 = vld [vmem:[#allocation2 + $0x80] sm:$0xff]
        %v801 = vld [vmem:[#allocation2 + $0x88] sm:$0xff]
        %v802 = vld [vmem:[#allocation2 + $0x90] sm:$0xff]
        %v803 = vld [vmem:[#allocation2 + $0x98] sm:$0xff]
        %v804 = vld [vmem:[#allocation2 + $0xa0] sm:$0xff]
        %v805 = vld [vmem:[#allocation2 + $0xa8] sm:$0xff]
        %v806 = vld [vmem:[#allocation2 + $0xb0] sm:$0xff]
        %v807 = vld [vmem:[#allocation2 + $0xb8] sm:$0xff]
        %v808 = vld [vmem:[#allocation2 + $0xc0] sm:$0xff]
        %v809 = vld [vmem:[#allocation2 + $0xc8] sm:$0xff]
        %v810 = vld [vmem:[#allocation2 + $0xd0] sm:$0xff]
        %v811 = vld [vmem:[#allocation2 + $0xd8] sm:$0xff]
        %v812 = vld [vmem:[#allocation2 + $0xe0] sm:$0xff]
        %v813 = vld [vmem:[#allocation2 + $0xe8] sm:$0xff]
        %v814 = vld [vmem:[#allocation2 + $0xf0] sm:$0xff]
        %v815 = vld [vmem:[#allocation2 + $0xf8] sm:$0xff]
        %816 = vmatprep.subr.mxu0 0.0
        %817 = vmatpush1.msra.mxu0 %v784
        %818 = vmatprep.subr.mxu0 0.0
        %819 = vmatpush1.msra.mxu0 %v785
        %820 = vmatprep.subr.mxu0 0.0
        %821 = vmatpush1.msra.mxu0 %v786
        %822 = vmatprep.subr.mxu0 0.0
        %823 = vmatpush1.msra.mxu0 %v787
        %824 = vmatprep.subr.mxu0 0.0
        %825 = vmatpush1.msra.mxu0 %v788
        %826 = vmatprep.subr.mxu0 0.0
        %827 = vmatpush1.msra.mxu0 %v789
        %828 = vmatprep.subr.mxu0 0.0
        %829 = vmatpush1.msra.mxu0 %v790
        %830 = vmatprep.subr.mxu0 0.0
        %831 = vmatpush1.msra.mxu0 %v791
        %832 = vmatprep.subr.mxu0 0.0
        %833 = vmatpush1.msra.mxu0 %v792
        %834 = vmatprep.subr.mxu0 0.0
        %835 = vmatpush1.msra.mxu0 %v793
        %836 = vmatprep.subr.mxu0 0.0
        %837 = vmatpush1.msra.mxu0 %v794
        %838 = vmatprep.subr.mxu0 0.0
        %839 = vmatpush1.msra.mxu0 %v795
        %840 = vmatprep.subr.mxu0 0.0
        %841 = vmatpush1.msra.mxu0 %v796
        %842 = vmatprep.subr.mxu0 0.0
        %843 = vmatpush1.msra.mxu0 %v797
        %844 = vmatprep.subr.mxu0 0.0
        %845 = vmatpush1.msra.mxu0 %v798
        %846 = vmatprep.subr.mxu0 0.0
        %847 = vmatpush1.msra.mxu0 %v799
        %848 = vmatprep.subr.mxu0 0.0
        %849 = vmatpush1.msra.mxu0 %v800
        %850 = vmatprep.subr.mxu0 0.0
        %851 = vmatpush1.msra.mxu0 %v801
        %852 = vmatprep.subr.mxu0 0.0
        %853 = vmatpush1.msra.mxu0 %v802
        %854 = vmatprep.subr.mxu0 0.0
        %855 = vmatpush1.msra.mxu0 %v803
        %856 = vmatprep.subr.mxu0 0.0
        %857 = vmatpush1.msra.mxu0 %v804
        %858 = vmatprep.subr.mxu0 0.0
        %859 = vmatpush1.msra.mxu0 %v805
        %860 = vmatprep.subr.mxu0 0.0
        %861 = vmatpush1.msra.mxu0 %v806
        %862 = vmatprep.subr.mxu0 0.0
        %863 = vmatpush1.msra.mxu0 %v807
        %864 = vmatprep.subr.mxu0 0.0
        %865 = vmatpush1.msra.mxu0 %v808
        %866 = vmatprep.subr.mxu0 0.0
        %867 = vmatpush1.msra.mxu0 %v809
        %868 = vmatprep.subr.mxu0 0.0
        %869 = vmatpush1.msra.mxu0 %v810
        %870 = vmatprep.subr.mxu0 0.0
        %871 = vmatpush1.msra.mxu0 %v811
        %872 = vmatprep.subr.mxu0 0.0
        %873 = vmatpush1.msra.mxu0 %v812
        %874 = vmatprep.subr.mxu0 0.0
        %875 = vmatpush1.msra.mxu0 %v813
        %876 = vmatprep.subr.mxu0 0.0
        %877 = vmatpush1.msra.mxu0 %v814
        %878 = vmatprep.subr.mxu0 0.0
        %879 = vmatpush1.msra.mxu0 %v815
        %880 = vmatprep.mubr.f32.mxu0 %v721
        %881 = vmatmul.mubr.f32.gmra.mrb[0].mxu0 %v720
        %v882 = vpop.f32.mrb[0].mxu0
        %v883 = vadd.f32 0.0, %v882
        %v884 = vpop.f32.mrb[0].mxu0
        %885 = vmatprep.mubr.f32.mxu0 %v723
        %886 = vmatmul.mubr.f32.gmra.mrb[0].mxu0 %v722
        %v887 = vpop.f32.mrb[0].mxu0
        %v888 = vadd.f32 0.0, %v887
        %v889 = vpop.f32.mrb[0].mxu0
        %890 = vmatprep.mubr.f32.mxu0 %v725
        %891 = vmatmul.mubr.f32.gmra.mrb[0].mxu0 %v724
        %v892 = vpop.f32.mrb[0].mxu0
        %v893 = vadd.f32 0.0, %v892
        %v894 = vpop.f32.mrb[0].mxu0
        %895 = vmatprep.mubr.f32.mxu0 %v727
        %896 = vmatmul.mubr.f32.gmra.mrb[0].mxu0 %v726
        %v897 = vpop.f32.mrb[0].mxu0
        %v898 = vadd.f32 0.0, %v897
        %v899 = vpop.f32.mrb[0].mxu0
        %900 = vmatprep.mubr.f32.mxu0 %v729
        %901 = vmatmul.mubr.f32.gmra.mrb[0].mxu0 %v728
        %v902 = vpop.f32.mrb[0].mxu0
        %v903 = vadd.f32 0.0, %v902
        %v904 = vpop.f32.mrb[0].mxu0
        %905 = vmatprep.mubr.f32.mxu0 %v731
        %906 = vmatmul.mubr.f32.gmra.mrb[0].mxu0 %v730
        %v907 = vpop.f32.mrb[0].mxu0
        %v908 = vadd.f32 0.0, %v907
        %v909 = vpop.f32.mrb[0].mxu0
        %910 = vmatprep.mubr.f32.mxu0 %v733
        %911 = vmatmul.mubr.f32.gmra.mrb[0].mxu0 %v732
        %v912 = vpop.f32.mrb[0].mxu0
        %v913 = vadd.f32 0.0, %v912
        %v914 = vpop.f32.mrb[0].mxu0
        %915 = vmatprep.mubr.f32.mxu0 %v735
        %916 = vmatmul.mubr.f32.gmra.mrb[0].mxu0 %v734
        %v917 = vpop.f32.mrb[0].mxu0
        %v918 = vadd.f32 0.0, %v917
        %v919 = vpop.f32.mrb[0].mxu0
        %920 = vmatprep.mubr.f32.mxu0 %v737
        %921 = vmatmul.mubr.f32.gmra.mrb[0].mxu0 %v736
        %v922 = vpop.f32.mrb[0].mxu0
        %v923 = vadd.f32 0.0, %v922
        %v924 = vpop.f32.mrb[0].mxu0
        %925 = vmatprep.mubr.f32.mxu0 %v739
        %926 = vmatmul.mubr.f32.gmra.mrb[0].mxu0 %v738
        %v927 = vpop.f32.mrb[0].mxu0
        %v928 = vadd.f32 0.0, %v927
        %v929 = vpop.f32.mrb[0].mxu0
        %930 = vmatprep.mubr.f32.mxu0 %v741
        %931 = vmatmul.mubr.f32.gmra.mrb[0].mxu0 %v740
        %v932 = vpop.f32.mrb[0].mxu0
        %v933 = vadd.f32 0.0, %v932
        %v934 = vpop.f32.mrb[0].mxu0
        %935 = vmatprep.mubr.f32.mxu0 %v743
        %936 = vmatmul.mubr.f32.gmra.mrb[0].mxu0 %v742
        %v937 = vpop.f32.mrb[0].mxu0
        %v938 = vadd.f32 0.0, %v937
        %v939 = vpop.f32.mrb[0].mxu0
        %940 = vmatprep.mubr.f32.mxu0 %v745
        %941 = vmatmul.mubr.f32.gmra.mrb[0].mxu0 %v744
        %v942 = vpop.f32.mrb[0].mxu0
        %v943 = vadd.f32 0.0, %v942
        %v944 = vpop.f32.mrb[0].mxu0
        %945 = vmatprep.mubr.f32.mxu0 %v747
        %946 = vmatmul.mubr.f32.gmra.mrb[0].mxu0 %v746
        %v947 = vpop.f32.mrb[0].mxu0
        %v948 = vadd.f32 0.0, %v947
        %v949 = vpop.f32.mrb[0].mxu0
        %950 = vmatprep.mubr.f32.mxu0 %v749
        %951 = vmatmul.mubr.f32.gmra.mrb[0].mxu0 %v748
        %v952 = vpop.f32.mrb[0].mxu0
        %v953 = vadd.f32 0.0, %v952
        %v954 = vpop.f32.mrb[0].mxu0
        %955 = vmatprep.mubr.f32.mxu0 %v751
        %956 = vmatmul.mubr.f32.gmra.mrb[0].mxu0 %v750
        %v957 = vpop.f32.mrb[0].mxu0
        %v958 = vadd.f32 0.0, %v957
        %v959 = vpop.f32.mrb[0].mxu0
        %960 = vmatprep.mubr.f32.mxu0 %v753
        %961 = vmatmul.mubr.f32.gmra.mrb[0].mxu0 %v752
        %v962 = vpop.f32.mrb[0].mxu0
        %v963 = vadd.f32 0.0, %v962
        %v964 = vpop.f32.mrb[0].mxu0
        %965 = vmatprep.mubr.f32.mxu0 %v755
        %966 = vmatmul.mubr.f32.gmra.mrb[0].mxu0 %v754
        %v967 = vpop.f32.mrb[0].mxu0
        %v968 = vadd.f32 0.0, %v967
        %v969 = vpop.f32.mrb[0].mxu0
        %970 = vmatprep.mubr.f32.mxu0 %v757
        %971 = vmatmul.mubr.f32.gmra.mrb[0].mxu0 %v756
        %v972 = vpop.f32.mrb[0].mxu0
        %v973 = vadd.f32 0.0, %v972
        %v974 = vpop.f32.mrb[0].mxu0
        %975 = vmatprep.mubr.f32.mxu0 %v759
        %976 = vmatmul.mubr.f32.gmra.mrb[0].mxu0 %v758
        %v977 = vpop.f32.mrb[0].mxu0
        %v978 = vadd.f32 0.0, %v977
        %v979 = vpop.f32.mrb[0].mxu0
        %980 = vmatprep.mubr.f32.mxu0 %v761
        %981 = vmatmul.mubr.f32.gmra.mrb[0].mxu0 %v760
        %v982 = vpop.f32.mrb[0].mxu0
        %v983 = vadd.f32 0.0, %v982
        %v984 = vpop.f32.mrb[0].mxu0
        %985 = vmatprep.mubr.f32.mxu0 %v763
        %986 = vmatmul.mubr.f32.gmra.mrb[0].mxu0 %v762
        %v987 = vpop.f32.mrb[0].mxu0
        %v988 = vadd.f32 0.0, %v987
        %v989 = vpop.f32.mrb[0].mxu0
        %990 = vmatprep.mubr.f32.mxu0 %v765
        %991 = vmatmul.mubr.f32.gmra.mrb[0].mxu0 %v764
        %v992 = vpop.f32.mrb[0].mxu0
        %v993 = vadd.f32 0.0, %v992
        %v994 = vpop.f32.mrb[0].mxu0
        %995 = vmatprep.mubr.f32.mxu0 %v767
        %996 = vmatmul.mubr.f32.gmra.mrb[0].mxu0 %v766
        %v997 = vpop.f32.mrb[0].mxu0
        %v998 = vadd.f32 0.0, %v997
        %v999 = vpop.f32.mrb[0].mxu0
        %1000 = vmatprep.mubr.f32.mxu0 %v769
        %1001 = vmatmul.mubr.f32.gmra.mrb[0].mxu0 %v768
        %v1002 = vpop.f32.mrb[0].mxu0
        %v1003 = vadd.f32 0.0, %v1002
        %v1004 = vpop.f32.mrb[0].mxu0
        %1005 = vmatprep.mubr.f32.mxu0 %v771
        %1006 = vmatmul.mubr.f32.gmra.mrb[0].mxu0 %v770
        %v1007 = vpop.f32.mrb[0].mxu0
        %v1008 = vadd.f32 0.0, %v1007
        %v1009 = vpop.f32.mrb[0].mxu0
        %1010 = vmatprep.mubr.f32.mxu0 %v773
        %1011 = vmatmul.mubr.f32.gmra.mrb[0].mxu0 %v772
        %v1012 = vpop.f32.mrb[0].mxu0
        %v1013 = vadd.f32 0.0, %v1012
        %v1014 = vpop.f32.mrb[0].mxu0
        %1015 = vmatprep.mubr.f32.mxu0 %v775
        %1016 = vmatmul.mubr.f32.gmra.mrb[0].mxu0 %v774
        %v1017 = vpop.f32.mrb[0].mxu0
        %v1018 = vadd.f32 0.0, %v1017
        %v1019 = vpop.f32.mrb[0].mxu0
        %1020 = vmatprep.mubr.f32.mxu0 %v777
        %1021 = vmatmul.mubr.f32.gmra.mrb[0].mxu0 %v776
        %v1022 = vpop.f32.mrb[0].mxu0
        %v1023 = vadd.f32 0.0, %v1022
        %v1024 = vpop.f32.mrb[0].mxu0
        %1025 = vmatprep.mubr.f32.mxu0 %v779
        %1026 = vmatmul.mubr.f32.gmra.mrb[0].mxu0 %v778
        %v1027 = vpop.f32.mrb[0].mxu0
        %v1028 = vadd.f32 0.0, %v1027
        %v1029 = vpop.f32.mrb[0].mxu0
        %1030 = vmatprep.mubr.f32.mxu0 %v781
        %1031 = vmatmul.mubr.f32.gmra.mrb[0].mxu0 %v780
        %v1032 = vpop.f32.mrb[0].mxu0
        %v1033 = vadd.f32 0.0, %v1032
        %v1034 = vpop.f32.mrb[0].mxu0
        %1035 = vmatprep.mubr.f32.mxu0 %v783
        %1036 = vmatmul.mubr.f32.gmra.mrb[0].mxu0 %v782
        %v1037 = vpop.f32.mrb[0].mxu0
        %v1038 = vadd.f32 0.0, %v1037
        %v1039 = vpop.f32.mrb[0].mxu0
        %1040 = vdwg.mxu0
        %v1041 = vmul.f32 %v883, 0.9
        %v1042 = vmul.f32 %v888, 0.9
        %v1043 = vmul.f32 %v893, 0.9
        %v1044 = vmul.f32 %v898, 0.9
        %v1045 = vmul.f32 %v903, 0.9
        %v1046 = vmul.f32 %v908, 0.9
        %v1047 = vmul.f32 %v913, 0.9
        %v1048 = vmul.f32 %v918, 0.9
        %v1049 = vmul.f32 %v923, 0.9
        %v1050 = vmul.f32 %v928, 0.9
        %v1051 = vmul.f32 %v933, 0.9
        %v1052 = vmul.f32 %v938, 0.9
        %v1053 = vmul.f32 %v943, 0.9
        %v1054 = vmul.f32 %v948, 0.9
        %v1055 = vmul.f32 %v953, 0.9
        %v1056 = vmul.f32 %v958, 0.9
        %v1057 = vmul.f32 %v963, 0.9
        %v1058 = vmul.f32 %v968, 0.9
        %v1059 = vmul.f32 %v973, 0.9
        %v1060 = vmul.f32 %v978, 0.9
        %v1061 = vmul.f32 %v983, 0.9
        %v1062 = vmul.f32 %v988, 0.9
        %v1063 = vmul.f32 %v993, 0.9
        %v1064 = vmul.f32 %v998, 0.9
        %v1065 = vmul.f32 %v1003, 0.9
        %v1066 = vmul.f32 %v1008, 0.9
        %v1067 = vmul.f32 %v1013, 0.9
        %v1068 = vmul.f32 %v1018, 0.9
        %v1069 = vmul.f32 %v1023, 0.9
        %v1070 = vmul.f32 %v1028, 0.9
        %v1071 = vmul.f32 %v1033, 0.9
        %v1072 = vmul.f32 %v1038, 0.9
        %s1073 = scalar_lea.vmem %s0, %s146
        %v1074 = vld [vmem:[%s1073] sm:$0xff]
        %v1075 = vld [vmem:[%s1073 + $0x8] sm:$0xff]
        %v1076 = vld [vmem:[%s1073 + $0x10] sm:$0xff]
        %v1077 = vld [vmem:[%s1073 + $0x18] sm:$0xff]
        %v1078 = vld [vmem:[%s1073 + $0x20] sm:$0xff]
        %v1079 = vld [vmem:[%s1073 + $0x28] sm:$0xff]
        %v1080 = vld [vmem:[%s1073 + $0x30] sm:$0xff]
        %v1081 = vld [vmem:[%s1073 + $0x38] sm:$0xff]
        %v1082 = vld [vmem:[%s1073 + $0x40] sm:$0xff]
        %v1083 = vld [vmem:[%s1073 + $0x48] sm:$0xff]
        %v1084 = vld [vmem:[%s1073 + $0x50] sm:$0xff]
        %v1085 = vld [vmem:[%s1073 + $0x58] sm:$0xff]
        %v1086 = vld [vmem:[%s1073 + $0x60] sm:$0xff]
        %v1087 = vld [vmem:[%s1073 + $0x68] sm:$0xff]
        %v1088 = vld [vmem:[%s1073 + $0x70] sm:$0xff]
        %v1089 = vld [vmem:[%s1073 + $0x78] sm:$0xff]
        %v1090 = vld [vmem:[%s1073 + $0x80] sm:$0xff]
        %v1091 = vld [vmem:[%s1073 + $0x88] sm:$0xff]
        %v1092 = vld [vmem:[%s1073 + $0x90] sm:$0xff]
        %v1093 = vld [vmem:[%s1073 + $0x98] sm:$0xff]
        %v1094 = vld [vmem:[%s1073 + $0xa0] sm:$0xff]
        %v1095 = vld [vmem:[%s1073 + $0xa8] sm:$0xff]
        %v1096 = vld [vmem:[%s1073 + $0xb0] sm:$0xff]
        %v1097 = vld [vmem:[%s1073 + $0xb8] sm:$0xff]
        %v1098 = vld [vmem:[%s1073 + $0xc0] sm:$0xff]
        %v1099 = vld [vmem:[%s1073 + $0xc8] sm:$0xff]
        %v1100 = vld [vmem:[%s1073 + $0xd0] sm:$0xff]
        %v1101 = vld [vmem:[%s1073 + $0xd8] sm:$0xff]
        %v1102 = vld [vmem:[%s1073 + $0xe0] sm:$0xff]
        %v1103 = vld [vmem:[%s1073 + $0xe8] sm:$0xff]
        %v1104 = vld [vmem:[%s1073 + $0xf0] sm:$0xff]
        %v1105 = vld [vmem:[%s1073 + $0xf8] sm:$0xff]
        %v1106 = vmul.f32 %v1074, 0.1
        %v1107 = vmul.f32 %v1075, 0.1
        %v1108 = vmul.f32 %v1076, 0.1
        %v1109 = vmul.f32 %v1077, 0.1
        %v1110 = vmul.f32 %v1078, 0.1
        %v1111 = vmul.f32 %v1079, 0.1
        %v1112 = vmul.f32 %v1080, 0.1
        %v1113 = vmul.f32 %v1081, 0.1
        %v1114 = vmul.f32 %v1082, 0.1
        %v1115 = vmul.f32 %v1083, 0.1
        %v1116 = vmul.f32 %v1084, 0.1
        %v1117 = vmul.f32 %v1085, 0.1
        %v1118 = vmul.f32 %v1086, 0.1
        %v1119 = vmul.f32 %v1087, 0.1
        %v1120 = vmul.f32 %v1088, 0.1
        %v1121 = vmul.f32 %v1089, 0.1
        %v1122 = vmul.f32 %v1090, 0.1
        %v1123 = vmul.f32 %v1091, 0.1
        %v1124 = vmul.f32 %v1092, 0.1
        %v1125 = vmul.f32 %v1093, 0.1
        %v1126 = vmul.f32 %v1094, 0.1
        %v1127 = vmul.f32 %v1095, 0.1
        %v1128 = vmul.f32 %v1096, 0.1
        %v1129 = vmul.f32 %v1097, 0.1
        %v1130 = vmul.f32 %v1098, 0.1
        %v1131 = vmul.f32 %v1099, 0.1
        %v1132 = vmul.f32 %v1100, 0.1
        %v1133 = vmul.f32 %v1101, 0.1
        %v1134 = vmul.f32 %v1102, 0.1
        %v1135 = vmul.f32 %v1103, 0.1
        %v1136 = vmul.f32 %v1104, 0.1
        %v1137 = vmul.f32 %v1105, 0.1
        %v1138 = vadd.f32 %v1041, %v1106
        %v1139 = vadd.f32 %v1042, %v1107
        %v1140 = vadd.f32 %v1043, %v1108
        %v1141 = vadd.f32 %v1044, %v1109
        %v1142 = vadd.f32 %v1045, %v1110
        %v1143 = vadd.f32 %v1046, %v1111
        %v1144 = vadd.f32 %v1047, %v1112
        %v1145 = vadd.f32 %v1048, %v1113
        %v1146 = vadd.f32 %v1049, %v1114
        %v1147 = vadd.f32 %v1050, %v1115
        %v1148 = vadd.f32 %v1051, %v1116
        %v1149 = vadd.f32 %v1052, %v1117
        %v1150 = vadd.f32 %v1053, %v1118
        %v1151 = vadd.f32 %v1054, %v1119
        %v1152 = vadd.f32 %v1055, %v1120
        %v1153 = vadd.f32 %v1056, %v1121
        %v1154 = vadd.f32 %v1057, %v1122
        %v1155 = vadd.f32 %v1058, %v1123
        %v1156 = vadd.f32 %v1059, %v1124
        %v1157 = vadd.f32 %v1060, %v1125
        %v1158 = vadd.f32 %v1061, %v1126
        %v1159 = vadd.f32 %v1062, %v1127
        %v1160 = vadd.f32 %v1063, %v1128
        %v1161 = vadd.f32 %v1064, %v1129
        %v1162 = vadd.f32 %v1065, %v1130
        %v1163 = vadd.f32 %v1066, %v1131
        %v1164 = vadd.f32 %v1067, %v1132
        %v1165 = vadd.f32 %v1068, %v1133
        %v1166 = vadd.f32 %v1069, %v1134
        %v1167 = vadd.f32 %v1070, %v1135
        %v1168 = vadd.f32 %v1071, %v1136
        %v1169 = vadd.f32 %v1072, %v1137
        %s1170 = scalar_lea.vmem %s2, %s146
        %1171 = vst [vmem:[%s1170] sm:$0xff] %v1138
        %1172 = vst [vmem:[%s1170 + $0x8] sm:$0xff] %v1139
        %1173 = vst [vmem:[%s1170 + $0x10] sm:$0xff] %v1140
        %1174 = vst [vmem:[%s1170 + $0x18] sm:$0xff] %v1141
        %1175 = vst [vmem:[%s1170 + $0x20] sm:$0xff] %v1142
        %1176 = vst [vmem:[%s1170 + $0x28] sm:$0xff] %v1143
        %1177 = vst [vmem:[%s1170 + $0x30] sm:$0xff] %v1144
        %1178 = vst [vmem:[%s1170 + $0x38] sm:$0xff] %v1145
        %1179 = vst [vmem:[%s1170 + $0x40] sm:$0xff] %v1146
        %1180 = vst [vmem:[%s1170 + $0x48] sm:$0xff] %v1147
        %1181 = vst [vmem:[%s1170 + $0x50] sm:$0xff] %v1148
        %1182 = vst [vmem:[%s1170 + $0x58] sm:$0xff] %v1149
        %1183 = vst [vmem:[%s1170 + $0x60] sm:$0xff] %v1150
        %1184 = vst [vmem:[%s1170 + $0x68] sm:$0xff] %v1151
        %1185 = vst [vmem:[%s1170 + $0x70] sm:$0xff] %v1152
        %1186 = vst [vmem:[%s1170 + $0x78] sm:$0xff] %v1153
        %1187 = vst [vmem:[%s1170 + $0x80] sm:$0xff] %v1154
        %1188 = vst [vmem:[%s1170 + $0x88] sm:$0xff] %v1155
        %1189 = vst [vmem:[%s1170 + $0x90] sm:$0xff] %v1156
        %1190 = vst [vmem:[%s1170 + $0x98] sm:$0xff] %v1157
        %1191 = vst [vmem:[%s1170 + $0xa0] sm:$0xff] %v1158
        %1192 = vst [vmem:[%s1170 + $0xa8] sm:$0xff] %v1159
        %1193 = vst [vmem:[%s1170 + $0xb0] sm:$0xff] %v1160
        %1194 = vst [vmem:[%s1170 + $0xb8] sm:$0xff] %v1161
        %1195 = vst [vmem:[%s1170 + $0xc0] sm:$0xff] %v1162
        %1196 = vst [vmem:[%s1170 + $0xc8] sm:$0xff] %v1163
        %1197 = vst [vmem:[%s1170 + $0xd0] sm:$0xff] %v1164
        %1198 = vst [vmem:[%s1170 + $0xd8] sm:$0xff] %v1165
        %1199 = vst [vmem:[%s1170 + $0xe0] sm:$0xff] %v1166
        %1200 = vst [vmem:[%s1170 + $0xe8] sm:$0xff] %v1167
        %1201 = vst [vmem:[%s1170 + $0xf0] sm:$0xff] %v1168
        %1202 = vst [vmem:[%s1170 + $0xf8] sm:$0xff] %v1169
      $region40: #{appnp_forward.3} parent=27 // pred_fallthru
        _
      // Predicated region
      $region41: #{appnp_forward.3} parent=27 // pred_check
        %p1203 = pneg %p85
      $region42: #{appnp_forward.3} parent=27 // pred_check_branch
        %1205 = sbr.rel (%p1203) target = $region44
      $region43: #{appnp_forward.3} parent=27 // pred_region
        _
      $region44: #{appnp_forward.3} parent=27 // pred_fallthru
        _
      // Predicated region
      $region45: #{appnp_forward.3} parent=27 // pred_check
        %p1206 = pneg %p85
      $region46: #{appnp_forward.3} parent=27 // pred_check_branch
        %1208 = sbr.rel (%p1206) target = $region48
      $region47: #{appnp_forward.3} parent=27 // pred_region
        _
      $region48: #{appnp_forward.3} parent=27 // pred_fallthru
        _
    $region28: #{appnp_forward.3} parent=5 // pred_fallthru
      _
    %p1209 = scmp.le.s32.totalorder 2, %s8
    // Predicated region
    $region49: #{appnp_forward.3} parent=5 // pred_check
      %p1210 = pneg %p1209
    $region50: #{appnp_forward.3} parent=5 // pred_check_branch
      %1212 = sbr.rel (%p1210) target = $region52
    $region51: #{appnp_forward.3} parent=5 // pred_region
      %s1213 = ssub.s32 %s8, 2
    $region52: #{appnp_forward.3} parent=5 // pred_fallthru
      _
  $region6: #{appnp_forward.3} parent=0 // loop_footer
    %s12 = sadd.s32 1, %s8
  $region7: #{appnp_forward.3} parent=0 // loop_footer_branch
    %7 = sbr.rel target = $region3
  $region8: #{appnp_forward.3} parent=0 // loop_exit
    _

</llo_original>
